<compile_context>
chip_gen: v7x
topology: tpu7x:2x2x1
jax: 0.10.0
libtpu: 0.0.40
codegen_flags: <defaults>
</compile_context>

<pallas_src>
import functools

import jax
import jax.numpy as jnp
from jax import lax
from jax.experimental import pallas as pl
from jax.experimental.pallas import tpu as pltpu


# --------------------------------------------------------------------------- #
# Packed-parameter layout, shared by the wrapper (packer) and the kernel.
# All small parameters live in one (C + C8, max(12, C)) f32 array:
#   rows 0..C-1   : per-channel columns / small matrices (see below)
#   rows C..C+C8-1, cols 0..C-1 : paw1 (PA hidden 1x1-conv weight, MXU LHS)
# --------------------------------------------------------------------------- #
def _psmall_layout(C, C8):
    pos = {}
    c = [0]

    def col(n):
        s = slice(c[0], c[0] + n)
        c[0] += n
        return s

    pos["b1"] = (slice(0, C), col(1))        # (C, 1)
    pos["b2"] = (slice(0, C), col(1))        # (C, 1)
    pos["cab2"] = (slice(0, C), col(1))      # (C, 1)
    pos["caw1_t"] = (slice(0, C), col(C8))   # (C, C8)  == caw1.T
    pos["caw2"] = (slice(0, C), col(C8))     # (C, C8)
    pos["pab1"] = (slice(0, C8), col(1))     # (C8, 1)
    pos["paw2"] = (slice(0, C8), col(1))     # (C8, 1)  == paw2.T
    pos["pab2"] = (slice(0, 1), col(1))      # (1, 1)
    pos["cab1"] = (slice(0, 1), col(C8))     # (1, C8)
    ncols = max(c[0], C)
    pos["paw1"] = (slice(C, C + C8), slice(0, C))    # (C8, C)
    return (C + C8, ncols), pos


# --------------------------------------------------------------------------- #
# Kernel
# --------------------------------------------------------------------------- #
def _fab_kernel(C, C8, K, W, x_ref, wconv_ref, psmall_ref, mask_ref, o_ref,
                stack_ref):
    """One grid step handles Bf batch images; x_ref block: (Bf, C, H*W)."""
    Bf, _, HW = x_ref.shape
    pad = K // 2
    cdt = stack_ref.dtype             # conv-matmul compute dtype (bf16 or f32)

    # ---- resident parameters: loaded once, shared by every batch slab ------
    w1 = wconv_ref[0]                                   # (C, K*K*C), cdt
    w2 = wconv_ref[1]
    masks = mask_ref[...]                               # (K*K-1, HW), f32
    ps = psmall_ref[...]                                # packed small params
    _, pos = _psmall_layout(C, C8)

    def P(name):
        rs, cs = pos[name]
        return ps[rs, cs]

    b1, b2 = P("b1"), P("b2")                           # (C, 1)
    caw1_t, caw2 = P("caw1_t"), P("caw2")               # (C, C8)
    cab1, cab2 = P("cab1"), P("cab2")                   # (1, C8), (C, 1)
    paw1 = P("paw1")                                    # (C8, C)
    pab1, paw2, pab2 = P("pab1"), P("paw2"), P("pab2")  # (C8,1),(C8,1),(1,1)

    # static tap table: (tap index, lane shift, mask row or None for center)
    taps, m = [], 0
    for tap in range(K * K):
        dy, dx = tap // K - pad, tap % K - pad
        if dy == 0 and dx == 0:
            taps.append((tap, 0, None))
        else:
            taps.append((tap, dy * W + dx, m))
            m += 1

    def conv_same(inp, w, b):
        """KxK 'same' conv as one (C, K*K*C) x (K*K*C, HW) MXU matmul.

        Shifted + masked taps are stored directly into the reusable VMEM
        scratch (tap*C is sublane aligned); no concatenate temporaries.
        """
        for tap, shift, mrow in taps:
            if mrow is None:
                piece = inp                                          # center
            else:
                piece = (pltpu.roll(inp, shift=(-shift) % HW, axis=1)   # XLU
                         * masks[mrow:mrow + 1, :])                     # VPU
            stack_ref[pl.ds(tap * C, C), :] = piece.astype(cdt)
        out = jnp.dot(w, stack_ref[...], preferred_element_type=jnp.float32)
        return out + b                                               # (C, HW)

    for bi in range(Bf):                     # static unroll over batch slabs
        x = x_ref[bi].astype(jnp.float32)                            # (C, HW)

        # res = relu(conv1(x)) + x ; res = conv2(res)
        res = jnp.maximum(conv_same(x, w1, b1), 0.0) + x
        res = conv_same(res, w2, b2)

        # CALayer: avg-pool -> 1x1 -> relu -> 1x1 -> sigmoid.  The two N=1
        # matmuls are done as VPU broadcast-multiply + tiny XLU reductions.
        pooled = jnp.mean(res, axis=1, keepdims=True)                # (C, 1)
        hid = jnp.maximum(
            jnp.sum(caw1_t * pooled, axis=0, keepdims=True) + cab1, 0.0)  # (1,C8)
        ca = jax.nn.sigmoid(
            jnp.sum(caw2 * hid, axis=1, keepdims=True) + cab2)      # (C, 1)
        res = res * ca

        # PALayer: per-pixel 1x1 -> relu -> 1x1(->1) -> sigmoid
        hid2 = jnp.maximum(
            jnp.dot(paw1, res, preferred_element_type=jnp.float32) + pab1,
            0.0)                                                     # (C8, HW)
        pa = jax.nn.sigmoid(
            jnp.sum(hid2 * paw2, axis=0, keepdims=True) + pab2)      # (1, HW)

        o_ref[bi] = (res * pa + x).astype(o_ref.dtype)


# --------------------------------------------------------------------------- #
# Wrapper
# --------------------------------------------------------------------------- #
def pack_fab_params(p, kernel_size, conv_dtype=jnp.bfloat16):
    """Repack natural (PyTorch-layout) parameters for the kernel.

    p: w1_hwio/w2_hwio (K,K,C,C), b1/b2 (C,), caw1 (C8,C), cab1 (C8,),
       caw2 (C,C8), cab2 (C,), paw1 (C8,C), pab1 (C8,), paw2 (1,C8), pab2 (1,)
    """
    K = kernel_size
    C = p["b1"].shape[0]
    C8 = p["cab1"].shape[0]
    KKC = K * K * C

    # conv weights -> (Cout, K*K*Cin); contraction index = tap*Cin + cin
    w1 = jnp.transpose(p["w1_hwio"].reshape(KKC, C), (1, 0))
    w2 = jnp.transpose(p["w2_hwio"].reshape(KKC, C), (1, 0))
    wconv = jnp.stack([w1, w2], axis=0).astype(conv_dtype)      # (2, C, KKC)

    shape, pos = _psmall_layout(C, C8)
    psmall = jnp.zeros(shape, jnp.float32)
    vals = dict(
        b1=p["b1"].reshape(C, 1), b2=p["b2"].reshape(C, 1),
        cab2=p["cab2"].reshape(C, 1),
        caw1_t=p["caw1"].T, caw2=p["caw2"],
        pab1=p["pab1"].reshape(C8, 1), paw2=p["paw2"].reshape(C8, 1),
        pab2=p["pab2"].reshape(1, 1), cab1=p["cab1"].reshape(1, C8),
        paw1=p["paw1"],
    )
    for name, v in vals.items():
        rs, cs = pos[name]
        psmall = psmall.at[rs, cs].set(v.astype(jnp.float32))

    return {"wconv": wconv, "psmall": psmall}


def _default_grid_steps(batch):
    """Single step on single-TC v5e/v6e; one batch group per TensorCore on v7x."""
    try:
        kind = jax.devices()[0].device_kind.lower()
    except Exception:
        kind = ""
    n_tc = 2 if "v7" in kind else 1
    return n_tc if (batch % n_tc == 0 and batch >= n_tc) else 1


def fab_block(x_nchw, packed, kernel_size=3, grid_steps=None):
    """FABlock forward. x_nchw: (B, C, H, W) float32. Returns (B, C, H, W)."""
    B, C, H, W = x_nchw.shape
    HW = H * W
    K = kernel_size
    wconv, psmall = packed["wconv"], packed["psmall"]
    assert wconv.shape[1] == C and wconv.shape[2] == K * K * C
    C8 = psmall.shape[0] - C
    conv_dtype = wconv.dtype

    steps = _default_grid_steps(B) if grid_steps is None else grid_steps
    if steps < 1 or B % steps != 0:
        steps = 1
    Bf = B // steps

    # Border-validity masks (one per non-center tap), grid-invariant.
    pad = K // 2
    pidx = jnp.arange(HW, dtype=jnp.int32)
    hh, ww = pidx // W, pidx % W
    rows = []
    for tap in range(K * K):
        dy, dx = tap // K - pad, tap % K - pad
        if dy == 0 and dx == 0:
            continue
        valid = ((hh + dy >= 0) & (hh + dy < H) &
                 (ww + dx >= 0) & (ww + dx < W))
        rows.append(valid.astype(jnp.float32))
    masks = jnp.stack(rows, axis=0)                          # (K*K-1, HW)

    x_flat = x_nchw.reshape(B, C, HW)                        # free reshape

    kernel = functools.partial(_fab_kernel, C, C8, K, W)

    # NOTE: for large H*W the (K*K*C, HW) stacked operand is what breaks VMEM
    # first (esp. v7x's 64 MiB); the scaling plan is to tile HW along the lane
    # axis with per-tile halos and raise vmem_limit_bytes.  Not needed here.
    out_flat = pl.pallas_call(
        kernel,
        out_shape=jax.ShapeDtypeStruct((B, C, HW), x_nchw.dtype),
        grid=(steps,),
        in_specs=[
            pl.BlockSpec((Bf, C, HW), lambda g: (g, 0, 0)),   # activations
            pl.BlockSpec(wconv.shape, lambda g: (0, 0, 0)),   # conv weights
            pl.BlockSpec(psmall.shape, lambda g: (0, 0)),     # packed params
            pl.BlockSpec(masks.shape, lambda g: (0, 0)),      # border masks
        ],
        out_specs=pl.BlockSpec((Bf, C, HW), lambda g: (g, 0, 0)),
        scratch_shapes=[pltpu.VMEM((K * K * C, HW), conv_dtype)],
        compiler_params=pltpu.CompilerParams(
            dimension_semantics=("parallel",)),
    )(x_flat, wconv, psmall, masks)

    return out_flat.reshape(B, C, H, W)


# ----------------------------- pure-JAX reference ---------------------------
def _conv_ref(x_nhwc, w_hwio, b):
    out = lax.conv_general_dilated(
        x_nhwc, w_hwio, window_strides=(1, 1), padding="SAME",
        dimension_numbers=("NHWC", "HWIO", "NHWC"),
        precision=lax.Precision.HIGHEST)
    return out + b                                            # b: (C,)


def fab_block_ref(x_nchw, p):
    x = jnp.transpose(x_nchw, (0, 2, 3, 1))                   # NHWC
    res = jax.nn.relu(_conv_ref(x, p["w1_hwio"], p["b1"])) + x
    res = _conv_ref(res, p["w2_hwio"], p["b2"])
    # CALayer
    y = jnp.mean(res, axis=(1, 2), keepdims=True)
    y = jax.nn.relu(jnp.einsum("bhwc,dc->bhwd", y, p["caw1"],
                               precision=lax.Precision.HIGHEST) + p["cab1"])
    y = jax.nn.sigmoid(jnp.einsum("bhwd,cd->bhwc", y, p["caw2"],
                                  precision=lax.Precision.HIGHEST) + p["cab2"])
    res = res * y
    # PALayer
    y = jax.nn.relu(jnp.einsum("bhwc,dc->bhwd", res, p["paw1"],
                               precision=lax.Precision.HIGHEST) + p["pab1"])
    y = jax.nn.sigmoid(jnp.einsum("bhwd,od->bhwo", y, p["paw2"],
                                  precision=lax.Precision.HIGHEST) + p["pab2"])
    res = res * y
    res = res + x
    return jnp.transpose(res, (0, 3, 1, 2))


# --------------------------------- main --------------------------------------
if __name__ == "__main__":
    B, C, H, W = 2, 16, 16, 16             # dim=16 -> dim//8 = 2 ; H*W = 256
    K = 3                                  # kernel_size
    C8 = C // 8

    key = jax.random.PRNGKey(0)
    keys = jax.random.split(key, 16)

    # Deterministic synthetic parameters (PyTorch init not reproduced; shapes match).
    w1_hwio = 0.1 * jax.random.normal(keys[0], (K, K, C, C), jnp.float32)
    b1 = 0.05 * jax.random.normal(keys[1], (C,), jnp.float32)
    w2_hwio = 0.1 * jax.random.normal(keys[2], (K, K, C, C), jnp.float32)
    b2 = 0.05 * jax.random.normal(keys[3], (C,), jnp.float32)
    caw1 = 0.2 * jax.random.normal(keys[4], (C8, C), jnp.float32)   # (out, in)
    cab1 = 0.05 * jax.random.normal(keys[5], (C8,), jnp.float32)
    caw2 = 0.2 * jax.random.normal(keys[6], (C, C8), jnp.float32)
    cab2 = 0.05 * jax.random.normal(keys[7], (C,), jnp.float32)
    paw1 = 0.2 * jax.random.normal(keys[8], (C8, C), jnp.float32)
    pab1 = 0.05 * jax.random.normal(keys[9], (C8,), jnp.float32)
    paw2 = 0.2 * jax.random.normal(keys[10], (1, C8), jnp.float32)
    pab2 = 0.05 * jax.random.normal(keys[11], (1,), jnp.float32)

    params = dict(w1_hwio=w1_hwio, b1=b1, w2_hwio=w2_hwio, b2=b2,
                  caw1=caw1, cab1=cab1, caw2=caw2, cab2=cab2,
                  paw1=paw1, pab1=pab1, paw2=paw2, pab2=pab2)

    x = jax.random.normal(keys[12], (B, C, H, W), jnp.float32)

    ref = jax.block_until_ready(fab_block_ref(x, params))

    # 1) exact path (f32 conv matmuls): tight tolerance.
    packed_f32 = pack_fab_params(params, K, conv_dtype=jnp.float32)
    out_f32 = jax.block_until_ready(fab_block(x, packed_f32, kernel_size=K))
    assert out_f32.shape == (B, C, H, W)
    assert jnp.isfinite(out_f32).all()
    err_f32 = float(jnp.max(jnp.abs(out_f32 - ref)))
    assert err_f32 < 2e-3, f"f32 path mismatch vs reference: max abs err {err_f32}"

    # 2) default perf path (bf16 conv matmul operands, f32 accumulate):
    #    bf16 input rounding bounds the error well below 3e-2 at these scales.
    packed_bf16 = pack_fab_params(params, K)            # conv_dtype = bf16
    out_bf16 = jax.block_until_ready(fab_block(x, packed_bf16, kernel_size=K))
    assert out_bf16.shape == (B, C, H, W)
    assert jnp.isfinite(out_bf16).all()
    err_bf16 = float(jnp.max(jnp.abs(out_bf16 - ref)))
    assert err_bf16 < 3e-2, f"bf16 path mismatch vs reference: max abs err {err_bf16}"

    print("KERNEL_OK")
</pallas_src>

<mosaic_0001>
module attributes {stable_mosaic.version = 11 : i64} {
  func.func @_fab_kernel(%arg0: i32, %arg1: memref<2x16x256xf32, #tpu.memory_space<vmem>>, %arg2: memref<2x16x144xf32, #tpu.memory_space<vmem>>, %arg3: memref<18x16xf32, #tpu.memory_space<vmem>>, %arg4: memref<8x256xf32, #tpu.memory_space<vmem>>, %arg5: memref<2x16x256xf32, #tpu.memory_space<vmem>>, %arg6: memref<144x256xf32, #tpu.memory_space<vmem>>) attributes {dimension_semantics = [#tpu.dimension_semantics<parallel>], iteration_bounds = array<i64: 1>, scalar_prefetch = 0 : i64, scratch_operands = 1 : i64, tpu.core_type = #tpu.core_type<tc>, window_params = [{transform_indices = @transform_0, window_bounds = array<i64: 2, 16, 256>}, {pipeline_mode = #tpu.pipeline_mode<synchronous>, transform_indices = @transform_1, window_bounds = array<i64: 2, 16, 144>}, {pipeline_mode = #tpu.pipeline_mode<synchronous>, transform_indices = @transform_2, window_bounds = array<i64: 18, 16>}, {pipeline_mode = #tpu.pipeline_mode<synchronous>, transform_indices = @transform_3, window_bounds = array<i64: 8, 256>}, {transform_indices = @transform_4, window_bounds = array<i64: 2, 16, 256>}]} {
    %c0 = arith.constant 0 : index
    %c0_0 = arith.constant 0 : index
    %c0_1 = arith.constant 0 : index
    %0 = vector.load %arg2[%c0, %c0_0, %c0_1] : memref<2x16x144xf32, #tpu.memory_space<vmem>>, vector<1x16x144xf32>
    %1 = vector.shape_cast %0 : vector<1x16x144xf32> to vector<16x144xf32>
    %c1 = arith.constant 1 : index
    %c0_2 = arith.constant 0 : index
    %c0_3 = arith.constant 0 : index
    %2 = vector.load %arg2[%c1, %c0_2, %c0_3] : memref<2x16x144xf32, #tpu.memory_space<vmem>>, vector<1x16x144xf32>
    %3 = vector.shape_cast %2 : vector<1x16x144xf32> to vector<16x144xf32>
    %c0_4 = arith.constant 0 : index
    %c0_5 = arith.constant 0 : index
    %4 = vector.load %arg4[%c0_4, %c0_5] : memref<8x256xf32, #tpu.memory_space<vmem>>, vector<8x256xf32>
    %c0_6 = arith.constant 0 : index
    %c0_7 = arith.constant 0 : index
    %5 = vector.load %arg3[%c0_6, %c0_7] : memref<18x16xf32, #tpu.memory_space<vmem>>, vector<18x16xf32>
    %6 = vector.extract_strided_slice %5 {offsets = [0, 0], sizes = [16, 1], strides = [1, 1]} : vector<18x16xf32> to vector<16x1xf32>
    %7 = vector.extract_strided_slice %5 {offsets = [0, 1], sizes = [16, 1], strides = [1, 1]} : vector<18x16xf32> to vector<16x1xf32>
    %8 = vector.extract_strided_slice %5 {offsets = [0, 3], sizes = [16, 2], strides = [1, 1]} : vector<18x16xf32> to vector<16x2xf32>
    %9 = vector.extract_strided_slice %5 {offsets = [0, 5], sizes = [16, 2], strides = [1, 1]} : vector<18x16xf32> to vector<16x2xf32>
    %10 = vector.extract_strided_slice %5 {offsets = [0, 10], sizes = [1, 2], strides = [1, 1]} : vector<18x16xf32> to vector<1x2xf32>
    %11 = vector.extract_strided_slice %5 {offsets = [0, 2], sizes = [16, 1], strides = [1, 1]} : vector<18x16xf32> to vector<16x1xf32>
    %12 = vector.extract_strided_slice %5 {offsets = [16, 0], sizes = [2, 16], strides = [1, 1]} : vector<18x16xf32> to vector<2x16xf32>
    %13 = vector.extract_strided_slice %5 {offsets = [0, 7], sizes = [2, 1], strides = [1, 1]} : vector<18x16xf32> to vector<2x1xf32>
    %14 = vector.extract_strided_slice %5 {offsets = [0, 8], sizes = [2, 1], strides = [1, 1]} : vector<18x16xf32> to vector<2x1xf32>
    %15 = vector.extract_strided_slice %5 {offsets = [0, 9], sizes = [1, 1], strides = [1, 1]} : vector<18x16xf32> to vector<1x1xf32>
    %c0_8 = arith.constant 0 : index
    %c0_9 = arith.constant 0 : index
    %c0_10 = arith.constant 0 : index
    %16 = vector.load %arg1[%c0_8, %c0_9, %c0_10] : memref<2x16x256xf32, #tpu.memory_space<vmem>>, vector<1x16x256xf32>
    %17 = vector.shape_cast %16 : vector<1x16x256xf32> to vector<16x256xf32>
    %c17_i32 = arith.constant 17 : i32
    %18 = tpu.dynamic_rotate %17 by %c17_i32 dim 1 : vector<16x256xf32>, i32 -> vector<16x256xf32>
    %19 = vector.extract_strided_slice %4 {offsets = [0, 0], sizes = [1, 256], strides = [1, 1]} : vector<8x256xf32> to vector<1x256xf32>
    %20 = vector.broadcast %19 : vector<1x256xf32> to vector<16x256xf32>
    %21 = arith.mulf %18, %20 : vector<16x256xf32>
    %c0_11 = arith.constant 0 : index
    %c0_12 = arith.constant 0 : index
    %22 = vector.load %arg6[%c0_11, %c0_12] : memref<144x256xf32, #tpu.memory_space<vmem>>, vector<16x256xf32>
    tpu.vector_store %arg6[%c0_11, %c0_12], %21 {strides = array<i32>} : memref<144x256xf32, #tpu.memory_space<vmem>>, vector<16x256xf32>,
    %c16_i32 = arith.constant 16 : i32
    %23 = tpu.dynamic_rotate %17 by %c16_i32 dim 1 : vector<16x256xf32>, i32 -> vector<16x256xf32>
    %24 = vector.extract_strided_slice %4 {offsets = [1, 0], sizes = [1, 256], strides = [1, 1]} : vector<8x256xf32> to vector<1x256xf32>
    %25 = vector.broadcast %24 : vector<1x256xf32> to vector<16x256xf32>
    %26 = arith.mulf %23, %25 : vector<16x256xf32>
    %c16 = arith.constant 16 : index
    %c0_13 = arith.constant 0 : index
    %27 = vector.load %arg6[%c16, %c0_13] : memref<144x256xf32, #tpu.memory_space<vmem>>, vector<16x256xf32>
    tpu.vector_store %arg6[%c16, %c0_13], %26 {strides = array<i32>} : memref<144x256xf32, #tpu.memory_space<vmem>>, vector<16x256xf32>,
    %c15_i32 = arith.constant 15 : i32
    %28 = tpu.dynamic_rotate %17 by %c15_i32 dim 1 : vector<16x256xf32>, i32 -> vector<16x256xf32>
    %29 = vector.extract_strided_slice %4 {offsets = [2, 0], sizes = [1, 256], strides = [1, 1]} : vector<8x256xf32> to vector<1x256xf32>
    %30 = vector.broadcast %29 : vector<1x256xf32> to vector<16x256xf32>
    %31 = arith.mulf %28, %30 : vector<16x256xf32>
    %c32 = arith.constant 32 : index
    %c0_14 = arith.constant 0 : index
    %32 = vector.load %arg6[%c32, %c0_14] : memref<144x256xf32, #tpu.memory_space<vmem>>, vector<16x256xf32>
    tpu.vector_store %arg6[%c32, %c0_14], %31 {strides = array<i32>} : memref<144x256xf32, #tpu.memory_space<vmem>>, vector<16x256xf32>,
    %c1_i32 = arith.constant 1 : i32
    %33 = tpu.dynamic_rotate %17 by %c1_i32 dim 1 : vector<16x256xf32>, i32 -> vector<16x256xf32>
    %34 = vector.extract_strided_slice %4 {offsets = [3, 0], sizes = [1, 256], strides = [1, 1]} : vector<8x256xf32> to vector<1x256xf32>
    %35 = vector.broadcast %34 : vector<1x256xf32> to vector<16x256xf32>
    %36 = arith.mulf %33, %35 : vector<16x256xf32>
    %c48 = arith.constant 48 : index
    %c0_15 = arith.constant 0 : index
    %37 = vector.load %arg6[%c48, %c0_15] : memref<144x256xf32, #tpu.memory_space<vmem>>, vector<16x256xf32>
    tpu.vector_store %arg6[%c48, %c0_15], %36 {strides = array<i32>} : memref<144x256xf32, #tpu.memory_space<vmem>>, vector<16x256xf32>,
    %c64 = arith.constant 64 : index
    %c0_16 = arith.constant 0 : index
    %38 = vector.load %arg6[%c64, %c0_16] : memref<144x256xf32, #tpu.memory_space<vmem>>, vector<16x256xf32>
    tpu.vector_store %arg6[%c64, %c0_16], %17 {strides = array<i32>} : memref<144x256xf32, #tpu.memory_space<vmem>>, vector<16x256xf32>,
    %c255_i32 = arith.constant 255 : i32
    %39 = tpu.dynamic_rotate %17 by %c255_i32 dim 1 : vector<16x256xf32>, i32 -> vector<16x256xf32>
    %40 = vector.extract_strided_slice %4 {offsets = [4, 0], sizes = [1, 256], strides = [1, 1]} : vector<8x256xf32> to vector<1x256xf32>
    %41 = vector.broadcast %40 : vector<1x256xf32> to vector<16x256xf32>
    %42 = arith.mulf %39, %41 : vector<16x256xf32>
    %c80 = arith.constant 80 : index
    %c0_17 = arith.constant 0 : index
    %43 = vector.load %arg6[%c80, %c0_17] : memref<144x256xf32, #tpu.memory_space<vmem>>, vector<16x256xf32>
    tpu.vector_store %arg6[%c80, %c0_17], %42 {strides = array<i32>} : memref<144x256xf32, #tpu.memory_space<vmem>>, vector<16x256xf32>,
    %c241_i32 = arith.constant 241 : i32
    %44 = tpu.dynamic_rotate %17 by %c241_i32 dim 1 : vector<16x256xf32>, i32 -> vector<16x256xf32>
    %45 = vector.extract_strided_slice %4 {offsets = [5, 0], sizes = [1, 256], strides = [1, 1]} : vector<8x256xf32> to vector<1x256xf32>
    %46 = vector.broadcast %45 : vector<1x256xf32> to vector<16x256xf32>
    %47 = arith.mulf %44, %46 : vector<16x256xf32>
    %c96 = arith.constant 96 : index
    %c0_18 = arith.constant 0 : index
    %48 = vector.load %arg6[%c96, %c0_18] : memref<144x256xf32, #tpu.memory_space<vmem>>, vector<16x256xf32>
    tpu.vector_store %arg6[%c96, %c0_18], %47 {strides = array<i32>} : memref<144x256xf32, #tpu.memory_space<vmem>>, vector<16x256xf32>,
    %c240_i32 = arith.constant 240 : i32
    %49 = tpu.dynamic_rotate %17 by %c240_i32 dim 1 : vector<16x256xf32>, i32 -> vector<16x256xf32>
    %50 = vector.extract_strided_slice %4 {offsets = [6, 0], sizes = [1, 256], strides = [1, 1]} : vector<8x256xf32> to vector<1x256xf32>
    %51 = vector.broadcast %50 : vector<1x256xf32> to vector<16x256xf32>
    %52 = arith.mulf %49, %51 : vector<16x256xf32>
    %c112 = arith.constant 112 : index
    %c0_19 = arith.constant 0 : index
    %53 = vector.load %arg6[%c112, %c0_19] : memref<144x256xf32, #tpu.memory_space<vmem>>, vector<16x256xf32>
    tpu.vector_store %arg6[%c112, %c0_19], %52 {strides = array<i32>} : memref<144x256xf32, #tpu.memory_space<vmem>>, vector<16x256xf32>,
    %c239_i32 = arith.constant 239 : i32
    %54 = tpu.dynamic_rotate %17 by %c239_i32 dim 1 : vector<16x256xf32>, i32 -> vector<16x256xf32>
    %55 = vector.extract_strided_slice %4 {offsets = [7, 0], sizes = [1, 256], strides = [1, 1]} : vector<8x256xf32> to vector<1x256xf32>
    %56 = vector.broadcast %55 : vector<1x256xf32> to vector<16x256xf32>
    %57 = arith.mulf %54, %56 : vector<16x256xf32>
    %c128 = arith.constant 128 : index
    %c0_20 = arith.constant 0 : index
    %58 = vector.load %arg6[%c128, %c0_20] : memref<144x256xf32, #tpu.memory_space<vmem>>, vector<16x256xf32>
    tpu.vector_store %arg6[%c128, %c0_20], %57 {strides = array<i32>} : memref<144x256xf32, #tpu.memory_space<vmem>>, vector<16x256xf32>,
    %c0_21 = arith.constant 0 : index
    %c0_22 = arith.constant 0 : index
    %59 = vector.load %arg6[%c0_21, %c0_22] : memref<144x256xf32, #tpu.memory_space<vmem>>, vector<144x256xf32>
    %cst = arith.constant dense<0.000000e+00> : vector<16x256xf32>
    %60 = tpu.matmul %1, %59, %cst {dimension_numbers = #tpu.dot_dimension_numbers<[1], [0], [0], [1], [0, 0, 1, 1], [], []>} : vector<16x144xf32>, vector<144x256xf32>, vector<16x256xf32> -> vector<16x256xf32>
    %61 = vector.broadcast %6 : vector<16x1xf32> to vector<16x256xf32>
    %62 = arith.addf %60, %61 : vector<16x256xf32>
    %cst_23 = arith.constant 0.000000e+00 : f32
    %63 = vector.broadcast %cst_23 : f32 to vector<16x256xf32>
    %64 = arith.maximumf %62, %63 : vector<16x256xf32>
    %65 = arith.addf %64, %17 : vector<16x256xf32>
    %c17_i32_24 = arith.constant 17 : i32
    %66 = tpu.dynamic_rotate %65 by %c17_i32_24 dim 1 : vector<16x256xf32>, i32 -> vector<16x256xf32>
    %67 = vector.extract_strided_slice %4 {offsets = [0, 0], sizes = [1, 256], strides = [1, 1]} : vector<8x256xf32> to vector<1x256xf32>
    %68 = vector.broadcast %67 : vector<1x256xf32> to vector<16x256xf32>
    %69 = arith.mulf %66, %68 : vector<16x256xf32>
    %c0_25 = arith.constant 0 : index
    %c0_26 = arith.constant 0 : index
    %70 = vector.load %arg6[%c0_25, %c0_26] : memref<144x256xf32, #tpu.memory_space<vmem>>, vector<16x256xf32>
    tpu.vector_store %arg6[%c0_25, %c0_26], %69 {strides = array<i32>} : memref<144x256xf32, #tpu.memory_space<vmem>>, vector<16x256xf32>,
    %c16_i32_27 = arith.constant 16 : i32
    %71 = tpu.dynamic_rotate %65 by %c16_i32_27 dim 1 : vector<16x256xf32>, i32 -> vector<16x256xf32>
    %72 = vector.extract_strided_slice %4 {offsets = [1, 0], sizes = [1, 256], strides = [1, 1]} : vector<8x256xf32> to vector<1x256xf32>
    %73 = vector.broadcast %72 : vector<1x256xf32> to vector<16x256xf32>
    %74 = arith.mulf %71, %73 : vector<16x256xf32>
    %c16_28 = arith.constant 16 : index
    %c0_29 = arith.constant 0 : index
    %75 = vector.load %arg6[%c16_28, %c0_29] : memref<144x256xf32, #tpu.memory_space<vmem>>, vector<16x256xf32>
    tpu.vector_store %arg6[%c16_28, %c0_29], %74 {strides = array<i32>} : memref<144x256xf32, #tpu.memory_space<vmem>>, vector<16x256xf32>,
    %c15_i32_30 = arith.constant 15 : i32
    %76 = tpu.dynamic_rotate %65 by %c15_i32_30 dim 1 : vector<16x256xf32>, i32 -> vector<16x256xf32>
    %77 = vector.extract_strided_slice %4 {offsets = [2, 0], sizes = [1, 256], strides = [1, 1]} : vector<8x256xf32> to vector<1x256xf32>
    %78 = vector.broadcast %77 : vector<1x256xf32> to vector<16x256xf32>
    %79 = arith.mulf %76, %78 : vector<16x256xf32>
    %c32_31 = arith.constant 32 : index
    %c0_32 = arith.constant 0 : index
    %80 = vector.load %arg6[%c32_31, %c0_32] : memref<144x256xf32, #tpu.memory_space<vmem>>, vector<16x256xf32>
    tpu.vector_store %arg6[%c32_31, %c0_32], %79 {strides = array<i32>} : memref<144x256xf32, #tpu.memory_space<vmem>>, vector<16x256xf32>,
    %c1_i32_33 = arith.constant 1 : i32
    %81 = tpu.dynamic_rotate %65 by %c1_i32_33 dim 1 : vector<16x256xf32>, i32 -> vector<16x256xf32>
    %82 = vector.extract_strided_slice %4 {offsets = [3, 0], sizes = [1, 256], strides = [1, 1]} : vector<8x256xf32> to vector<1x256xf32>
    %83 = vector.broadcast %82 : vector<1x256xf32> to vector<16x256xf32>
    %84 = arith.mulf %81, %83 : vector<16x256xf32>
    %c48_34 = arith.constant 48 : index
    %c0_35 = arith.constant 0 : index
    %85 = vector.load %arg6[%c48_34, %c0_35] : memref<144x256xf32, #tpu.memory_space<vmem>>, vector<16x256xf32>
    tpu.vector_store %arg6[%c48_34, %c0_35], %84 {strides = array<i32>} : memref<144x256xf32, #tpu.memory_space<vmem>>, vector<16x256xf32>,
    %c64_36 = arith.constant 64 : index
    %c0_37 = arith.constant 0 : index
    %86 = vector.load %arg6[%c64_36, %c0_37] : memref<144x256xf32, #tpu.memory_space<vmem>>, vector<16x256xf32>
    tpu.vector_store %arg6[%c64_36, %c0_37], %65 {strides = array<i32>} : memref<144x256xf32, #tpu.memory_space<vmem>>, vector<16x256xf32>,
    %c255_i32_38 = arith.constant 255 : i32
    %87 = tpu.dynamic_rotate %65 by %c255_i32_38 dim 1 : vector<16x256xf32>, i32 -> vector<16x256xf32>
    %88 = vector.extract_strided_slice %4 {offsets = [4, 0], sizes = [1, 256], strides = [1, 1]} : vector<8x256xf32> to vector<1x256xf32>
    %89 = vector.broadcast %88 : vector<1x256xf32> to vector<16x256xf32>
    %90 = arith.mulf %87, %89 : vector<16x256xf32>
    %c80_39 = arith.constant 80 : index
    %c0_40 = arith.constant 0 : index
    %91 = vector.load %arg6[%c80_39, %c0_40] : memref<144x256xf32, #tpu.memory_space<vmem>>, vector<16x256xf32>
    tpu.vector_store %arg6[%c80_39, %c0_40], %90 {strides = array<i32>} : memref<144x256xf32, #tpu.memory_space<vmem>>, vector<16x256xf32>,
    %c241_i32_41 = arith.constant 241 : i32
    %92 = tpu.dynamic_rotate %65 by %c241_i32_41 dim 1 : vector<16x256xf32>, i32 -> vector<16x256xf32>
    %93 = vector.extract_strided_slice %4 {offsets = [5, 0], sizes = [1, 256], strides = [1, 1]} : vector<8x256xf32> to vector<1x256xf32>
    %94 = vector.broadcast %93 : vector<1x256xf32> to vector<16x256xf32>
    %95 = arith.mulf %92, %94 : vector<16x256xf32>
    %c96_42 = arith.constant 96 : index
    %c0_43 = arith.constant 0 : index
    %96 = vector.load %arg6[%c96_42, %c0_43] : memref<144x256xf32, #tpu.memory_space<vmem>>, vector<16x256xf32>
    tpu.vector_store %arg6[%c96_42, %c0_43], %95 {strides = array<i32>} : memref<144x256xf32, #tpu.memory_space<vmem>>, vector<16x256xf32>,
    %c240_i32_44 = arith.constant 240 : i32
    %97 = tpu.dynamic_rotate %65 by %c240_i32_44 dim 1 : vector<16x256xf32>, i32 -> vector<16x256xf32>
    %98 = vector.extract_strided_slice %4 {offsets = [6, 0], sizes = [1, 256], strides = [1, 1]} : vector<8x256xf32> to vector<1x256xf32>
    %99 = vector.broadcast %98 : vector<1x256xf32> to vector<16x256xf32>
    %100 = arith.mulf %97, %99 : vector<16x256xf32>
    %c112_45 = arith.constant 112 : index
    %c0_46 = arith.constant 0 : index
    %101 = vector.load %arg6[%c112_45, %c0_46] : memref<144x256xf32, #tpu.memory_space<vmem>>, vector<16x256xf32>
    tpu.vector_store %arg6[%c112_45, %c0_46], %100 {strides = array<i32>} : memref<144x256xf32, #tpu.memory_space<vmem>>, vector<16x256xf32>,
    %c239_i32_47 = arith.constant 239 : i32
    %102 = tpu.dynamic_rotate %65 by %c239_i32_47 dim 1 : vector<16x256xf32>, i32 -> vector<16x256xf32>
    %103 = vector.extract_strided_slice %4 {offsets = [7, 0], sizes = [1, 256], strides = [1, 1]} : vector<8x256xf32> to vector<1x256xf32>
    %104 = vector.broadcast %103 : vector<1x256xf32> to vector<16x256xf32>
    %105 = arith.mulf %102, %104 : vector<16x256xf32>
    %c128_48 = arith.constant 128 : index
    %c0_49 = arith.constant 0 : index
    %106 = vector.load %arg6[%c128_48, %c0_49] : memref<144x256xf32, #tpu.memory_space<vmem>>, vector<16x256xf32>
    tpu.vector_store %arg6[%c128_48, %c0_49], %105 {strides = array<i32>} : memref<144x256xf32, #tpu.memory_space<vmem>>, vector<16x256xf32>,
    %c0_50 = arith.constant 0 : index
    %c0_51 = arith.constant 0 : index
    %107 = vector.load %arg6[%c0_50, %c0_51] : memref<144x256xf32, #tpu.memory_space<vmem>>, vector<144x256xf32>
    %cst_52 = arith.constant dense<0.000000e+00> : vector<16x256xf32>
    %108 = tpu.matmul %3, %107, %cst_52 {dimension_numbers = #tpu.dot_dimension_numbers<[1], [0], [0], [1], [0, 0, 1, 1], [], []>} : vector<16x144xf32>, vector<144x256xf32>, vector<16x256xf32> -> vector<16x256xf32>
    %109 = vector.broadcast %7 : vector<16x1xf32> to vector<16x256xf32>
    %110 = arith.addf %108, %109 : vector<16x256xf32>
    %cst_53 = arith.constant dense<0.000000e+00> : vector<16xf32>
    %111 = vector.multi_reduction <add>, %110, %cst_53 [1] : vector<16x256xf32> to vector<16xf32>
    %112 = vector.shape_cast %111 : vector<16xf32> to vector<16x1xf32>
    %cst_54 = arith.constant 2.560000e+02 : f32
    %113 = vector.broadcast %cst_54 : f32 to vector<16x1xf32>
    %114 = arith.divf %112, %113 : vector<16x1xf32>
    %115 = vector.broadcast %114 : vector<16x1xf32> to vector<16x2xf32>
    %116 = arith.mulf %8, %115 : vector<16x2xf32>
    %cst_55 = arith.constant dense<0.000000e+00> : vector<2xf32>
    %117 = vector.multi_reduction <add>, %116, %cst_55 [0] : vector<16x2xf32> to vector<2xf32>
    %118 = vector.shape_cast %117 : vector<2xf32> to vector<1x2xf32>
    %119 = arith.addf %118, %10 : vector<1x2xf32>
    %cst_56 = arith.constant 0.000000e+00 : f32
    %120 = vector.broadcast %cst_56 : f32 to vector<1x2xf32>
    %121 = arith.maximumf %119, %120 : vector<1x2xf32>
    %122 = vector.broadcast %121 : vector<1x2xf32> to vector<16x2xf32>
    %123 = arith.mulf %9, %122 : vector<16x2xf32>
    %cst_57 = arith.constant dense<0.000000e+00> : vector<16xf32>
    %124 = vector.multi_reduction <add>, %123, %cst_57 [1] : vector<16x2xf32> to vector<16xf32>
    %125 = vector.shape_cast %124 : vector<16xf32> to vector<16x1xf32>
    %126 = arith.addf %125, %11 : vector<16x1xf32>
    %127 = arith.negf %126 : vector<16x1xf32>
    %128 = math.exp %127 : vector<16x1xf32>
    %cst_58 = arith.constant 1.000000e+00 : f32
    %129 = vector.broadcast %cst_58 : f32 to vector<16x1xf32>
    %130 = arith.addf %129, %128 : vector<16x1xf32>
    %131 = arith.divf %129, %130 : vector<16x1xf32>
    %132 = vector.broadcast %131 : vector<16x1xf32> to vector<16x256xf32>
    %133 = arith.mulf %110, %132 : vector<16x256xf32>
    %cst_59 = arith.constant dense<0.000000e+00> : vector<2x256xf32>
    %134 = tpu.matmul %12, %133, %cst_59 {dimension_numbers = #tpu.dot_dimension_numbers<[1], [0], [0], [1], [0, 0, 1, 1], [], []>} : vector<2x16xf32>, vector<16x256xf32>, vector<2x256xf32> -> vector<2x256xf32>
    %135 = vector.broadcast %13 : vector<2x1xf32> to vector<2x256xf32>
    %136 = arith.addf %134, %135 : vector<2x256xf32>
    %cst_60 = arith.constant 0.000000e+00 : f32
    %137 = vector.broadcast %cst_60 : f32 to vector<2x256xf32>
    %138 = arith.maximumf %136, %137 : vector<2x256xf32>
    %139 = vector.broadcast %14 : vector<2x1xf32> to vector<2x256xf32>
    %140 = arith.mulf %138, %139 : vector<2x256xf32>
    %cst_61 = arith.constant dense<0.000000e+00> : vector<256xf32>
    %141 = vector.multi_reduction <add>, %140, %cst_61 [0] : vector<2x256xf32> to vector<256xf32>
    %142 = vector.shape_cast %141 : vector<256xf32> to vector<1x256xf32>
    %143 = vector.broadcast %15 : vector<1x1xf32> to vector<1x256xf32>
    %144 = arith.addf %142, %143 : vector<1x256xf32>
    %145 = arith.negf %144 : vector<1x256xf32>
    %146 = math.exp %145 : vector<1x256xf32>
    %cst_62 = arith.constant 1.000000e+00 : f32
    %147 = vector.broadcast %cst_62 : f32 to vector<1x256xf32>
    %148 = arith.addf %147, %146 : vector<1x256xf32>
    %149 = arith.divf %147, %148 : vector<1x256xf32>
    %150 = vector.broadcast %149 : vector<1x256xf32> to vector<16x256xf32>
    %151 = arith.mulf %133, %150 : vector<16x256xf32>
    %152 = arith.addf %151, %17 : vector<16x256xf32>
    %c0_63 = arith.constant 0 : index
    %c0_64 = arith.constant 0 : index
    %c0_65 = arith.constant 0 : index
    %153 = vector.load %arg5[%c0_63, %c0_64, %c0_65] : memref<2x16x256xf32, #tpu.memory_space<vmem>>, vector<1x16x256xf32>
    %154 = vector.shape_cast %153 : vector<1x16x256xf32> to vector<16x256xf32>
    %155 = vector.shape_cast %152 : vector<16x256xf32> to vector<1x16x256xf32>
    tpu.vector_store %arg5[%c0_63, %c0_64, %c0_65], %155 {strides = array<i32>} : memref<2x16x256xf32, #tpu.memory_space<vmem>>, vector<1x16x256xf32>,
    %c1_66 = arith.constant 1 : index
    %c0_67 = arith.constant 0 : index
    %c0_68 = arith.constant 0 : index
    %156 = vector.load %arg1[%c1_66, %c0_67, %c0_68] : memref<2x16x256xf32, #tpu.memory_space<vmem>>, vector<1x16x256xf32>
    %157 = vector.shape_cast %156 : vector<1x16x256xf32> to vector<16x256xf32>
    %c17_i32_69 = arith.constant 17 : i32
    %158 = tpu.dynamic_rotate %157 by %c17_i32_69 dim 1 : vector<16x256xf32>, i32 -> vector<16x256xf32>
    %159 = vector.extract_strided_slice %4 {offsets = [0, 0], sizes = [1, 256], strides = [1, 1]} : vector<8x256xf32> to vector<1x256xf32>
    %160 = vector.broadcast %159 : vector<1x256xf32> to vector<16x256xf32>
    %161 = arith.mulf %158, %160 : vector<16x256xf32>
    %c0_70 = arith.constant 0 : index
    %c0_71 = arith.constant 0 : index
    %162 = vector.load %arg6[%c0_70, %c0_71] : memref<144x256xf32, #tpu.memory_space<vmem>>, vector<16x256xf32>
    tpu.vector_store %arg6[%c0_70, %c0_71], %161 {strides = array<i32>} : memref<144x256xf32, #tpu.memory_space<vmem>>, vector<16x256xf32>,
    %c16_i32_72 = arith.constant 16 : i32
    %163 = tpu.dynamic_rotate %157 by %c16_i32_72 dim 1 : vector<16x256xf32>, i32 -> vector<16x256xf32>
    %164 = vector.extract_strided_slice %4 {offsets = [1, 0], sizes = [1, 256], strides = [1, 1]} : vector<8x256xf32> to vector<1x256xf32>
    %165 = vector.broadcast %164 : vector<1x256xf32> to vector<16x256xf32>
    %166 = arith.mulf %163, %165 : vector<16x256xf32>
    %c16_73 = arith.constant 16 : index
    %c0_74 = arith.constant 0 : index
    %167 = vector.load %arg6[%c16_73, %c0_74] : memref<144x256xf32, #tpu.memory_space<vmem>>, vector<16x256xf32>
    tpu.vector_store %arg6[%c16_73, %c0_74], %166 {strides = array<i32>} : memref<144x256xf32, #tpu.memory_space<vmem>>, vector<16x256xf32>,
    %c15_i32_75 = arith.constant 15 : i32
    %168 = tpu.dynamic_rotate %157 by %c15_i32_75 dim 1 : vector<16x256xf32>, i32 -> vector<16x256xf32>
    %169 = vector.extract_strided_slice %4 {offsets = [2, 0], sizes = [1, 256], strides = [1, 1]} : vector<8x256xf32> to vector<1x256xf32>
    %170 = vector.broadcast %169 : vector<1x256xf32> to vector<16x256xf32>
    %171 = arith.mulf %168, %170 : vector<16x256xf32>
    %c32_76 = arith.constant 32 : index
    %c0_77 = arith.constant 0 : index
    %172 = vector.load %arg6[%c32_76, %c0_77] : memref<144x256xf32, #tpu.memory_space<vmem>>, vector<16x256xf32>
    tpu.vector_store %arg6[%c32_76, %c0_77], %171 {strides = array<i32>} : memref<144x256xf32, #tpu.memory_space<vmem>>, vector<16x256xf32>,
    %c1_i32_78 = arith.constant 1 : i32
    %173 = tpu.dynamic_rotate %157 by %c1_i32_78 dim 1 : vector<16x256xf32>, i32 -> vector<16x256xf32>
    %174 = vector.extract_strided_slice %4 {offsets = [3, 0], sizes = [1, 256], strides = [1, 1]} : vector<8x256xf32> to vector<1x256xf32>
    %175 = vector.broadcast %174 : vector<1x256xf32> to vector<16x256xf32>
    %176 = arith.mulf %173, %175 : vector<16x256xf32>
    %c48_79 = arith.constant 48 : index
    %c0_80 = arith.constant 0 : index
    %177 = vector.load %arg6[%c48_79, %c0_80] : memref<144x256xf32, #tpu.memory_space<vmem>>, vector<16x256xf32>
    tpu.vector_store %arg6[%c48_79, %c0_80], %176 {strides = array<i32>} : memref<144x256xf32, #tpu.memory_space<vmem>>, vector<16x256xf32>,
    %c64_81 = arith.constant 64 : index
    %c0_82 = arith.constant 0 : index
    %178 = vector.load %arg6[%c64_81, %c0_82] : memref<144x256xf32, #tpu.memory_space<vmem>>, vector<16x256xf32>
    tpu.vector_store %arg6[%c64_81, %c0_82], %157 {strides = array<i32>} : memref<144x256xf32, #tpu.memory_space<vmem>>, vector<16x256xf32>,
    %c255_i32_83 = arith.constant 255 : i32
    %179 = tpu.dynamic_rotate %157 by %c255_i32_83 dim 1 : vector<16x256xf32>, i32 -> vector<16x256xf32>
    %180 = vector.extract_strided_slice %4 {offsets = [4, 0], sizes = [1, 256], strides = [1, 1]} : vector<8x256xf32> to vector<1x256xf32>
    %181 = vector.broadcast %180 : vector<1x256xf32> to vector<16x256xf32>
    %182 = arith.mulf %179, %181 : vector<16x256xf32>
    %c80_84 = arith.constant 80 : index
    %c0_85 = arith.constant 0 : index
    %183 = vector.load %arg6[%c80_84, %c0_85] : memref<144x256xf32, #tpu.memory_space<vmem>>, vector<16x256xf32>
    tpu.vector_store %arg6[%c80_84, %c0_85], %182 {strides = array<i32>} : memref<144x256xf32, #tpu.memory_space<vmem>>, vector<16x256xf32>,
    %c241_i32_86 = arith.constant 241 : i32
    %184 = tpu.dynamic_rotate %157 by %c241_i32_86 dim 1 : vector<16x256xf32>, i32 -> vector<16x256xf32>
    %185 = vector.extract_strided_slice %4 {offsets = [5, 0], sizes = [1, 256], strides = [1, 1]} : vector<8x256xf32> to vector<1x256xf32>
    %186 = vector.broadcast %185 : vector<1x256xf32> to vector<16x256xf32>
    %187 = arith.mulf %184, %186 : vector<16x256xf32>
    %c96_87 = arith.constant 96 : index
    %c0_88 = arith.constant 0 : index
    %188 = vector.load %arg6[%c96_87, %c0_88] : memref<144x256xf32, #tpu.memory_space<vmem>>, vector<16x256xf32>
    tpu.vector_store %arg6[%c96_87, %c0_88], %187 {strides = array<i32>} : memref<144x256xf32, #tpu.memory_space<vmem>>, vector<16x256xf32>,
    %c240_i32_89 = arith.constant 240 : i32
    %189 = tpu.dynamic_rotate %157 by %c240_i32_89 dim 1 : vector<16x256xf32>, i32 -> vector<16x256xf32>
    %190 = vector.extract_strided_slice %4 {offsets = [6, 0], sizes = [1, 256], strides = [1, 1]} : vector<8x256xf32> to vector<1x256xf32>
    %191 = vector.broadcast %190 : vector<1x256xf32> to vector<16x256xf32>
    %192 = arith.mulf %189, %191 : vector<16x256xf32>
    %c112_90 = arith.constant 112 : index
    %c0_91 = arith.constant 0 : index
    %193 = vector.load %arg6[%c112_90, %c0_91] : memref<144x256xf32, #tpu.memory_space<vmem>>, vector<16x256xf32>
    tpu.vector_store %arg6[%c112_90, %c0_91], %192 {strides = array<i32>} : memref<144x256xf32, #tpu.memory_space<vmem>>, vector<16x256xf32>,
    %c239_i32_92 = arith.constant 239 : i32
    %194 = tpu.dynamic_rotate %157 by %c239_i32_92 dim 1 : vector<16x256xf32>, i32 -> vector<16x256xf32>
    %195 = vector.extract_strided_slice %4 {offsets = [7, 0], sizes = [1, 256], strides = [1, 1]} : vector<8x256xf32> to vector<1x256xf32>
    %196 = vector.broadcast %195 : vector<1x256xf32> to vector<16x256xf32>
    %197 = arith.mulf %194, %196 : vector<16x256xf32>
    %c128_93 = arith.constant 128 : index
    %c0_94 = arith.constant 0 : index
    %198 = vector.load %arg6[%c128_93, %c0_94] : memref<144x256xf32, #tpu.memory_space<vmem>>, vector<16x256xf32>
    tpu.vector_store %arg6[%c128_93, %c0_94], %197 {strides = array<i32>} : memref<144x256xf32, #tpu.memory_space<vmem>>, vector<16x256xf32>,
    %c0_95 = arith.constant 0 : index
    %c0_96 = arith.constant 0 : index
    %199 = vector.load %arg6[%c0_95, %c0_96] : memref<144x256xf32, #tpu.memory_space<vmem>>, vector<144x256xf32>
    %cst_97 = arith.constant dense<0.000000e+00> : vector<16x256xf32>
    %200 = tpu.matmul %1, %199, %cst_97 {dimension_numbers = #tpu.dot_dimension_numbers<[1], [0], [0], [1], [0, 0, 1, 1], [], []>} : vector<16x144xf32>, vector<144x256xf32>, vector<16x256xf32> -> vector<16x256xf32>
    %201 = vector.broadcast %6 : vector<16x1xf32> to vector<16x256xf32>
    %202 = arith.addf %200, %201 : vector<16x256xf32>
    %cst_98 = arith.constant 0.000000e+00 : f32
    %203 = vector.broadcast %cst_98 : f32 to vector<16x256xf32>
    %204 = arith.maximumf %202, %203 : vector<16x256xf32>
    %205 = arith.addf %204, %157 : vector<16x256xf32>
    %c17_i32_99 = arith.constant 17 : i32
    %206 = tpu.dynamic_rotate %205 by %c17_i32_99 dim 1 : vector<16x256xf32>, i32 -> vector<16x256xf32>
    %207 = vector.extract_strided_slice %4 {offsets = [0, 0], sizes = [1, 256], strides = [1, 1]} : vector<8x256xf32> to vector<1x256xf32>
    %208 = vector.broadcast %207 : vector<1x256xf32> to vector<16x256xf32>
    %209 = arith.mulf %206, %208 : vector<16x256xf32>
    %c0_100 = arith.constant 0 : index
    %c0_101 = arith.constant 0 : index
    %210 = vector.load %arg6[%c0_100, %c0_101] : memref<144x256xf32, #tpu.memory_space<vmem>>, vector<16x256xf32>
    tpu.vector_store %arg6[%c0_100, %c0_101], %209 {strides = array<i32>} : memref<144x256xf32, #tpu.memory_space<vmem>>, vector<16x256xf32>,
    %c16_i32_102 = arith.constant 16 : i32
    %211 = tpu.dynamic_rotate %205 by %c16_i32_102 dim 1 : vector<16x256xf32>, i32 -> vector<16x256xf32>
    %212 = vector.extract_strided_slice %4 {offsets = [1, 0], sizes = [1, 256], strides = [1, 1]} : vector<8x256xf32> to vector<1x256xf32>
    %213 = vector.broadcast %212 : vector<1x256xf32> to vector<16x256xf32>
    %214 = arith.mulf %211, %213 : vector<16x256xf32>
    %c16_103 = arith.constant 16 : index
    %c0_104 = arith.constant 0 : index
    %215 = vector.load %arg6[%c16_103, %c0_104] : memref<144x256xf32, #tpu.memory_space<vmem>>, vector<16x256xf32>
    tpu.vector_store %arg6[%c16_103, %c0_104], %214 {strides = array<i32>} : memref<144x256xf32, #tpu.memory_space<vmem>>, vector<16x256xf32>,
    %c15_i32_105 = arith.constant 15 : i32
    %216 = tpu.dynamic_rotate %205 by %c15_i32_105 dim 1 : vector<16x256xf32>, i32 -> vector<16x256xf32>
    %217 = vector.extract_strided_slice %4 {offsets = [2, 0], sizes = [1, 256], strides = [1, 1]} : vector<8x256xf32> to vector<1x256xf32>
    %218 = vector.broadcast %217 : vector<1x256xf32> to vector<16x256xf32>
    %219 = arith.mulf %216, %218 : vector<16x256xf32>
    %c32_106 = arith.constant 32 : index
    %c0_107 = arith.constant 0 : index
    %220 = vector.load %arg6[%c32_106, %c0_107] : memref<144x256xf32, #tpu.memory_space<vmem>>, vector<16x256xf32>
    tpu.vector_store %arg6[%c32_106, %c0_107], %219 {strides = array<i32>} : memref<144x256xf32, #tpu.memory_space<vmem>>, vector<16x256xf32>,
    %c1_i32_108 = arith.constant 1 : i32
    %221 = tpu.dynamic_rotate %205 by %c1_i32_108 dim 1 : vector<16x256xf32>, i32 -> vector<16x256xf32>
    %222 = vector.extract_strided_slice %4 {offsets = [3, 0], sizes = [1, 256], strides = [1, 1]} : vector<8x256xf32> to vector<1x256xf32>
    %223 = vector.broadcast %222 : vector<1x256xf32> to vector<16x256xf32>
    %224 = arith.mulf %221, %223 : vector<16x256xf32>
    %c48_109 = arith.constant 48 : index
    %c0_110 = arith.constant 0 : index
    %225 = vector.load %arg6[%c48_109, %c0_110] : memref<144x256xf32, #tpu.memory_space<vmem>>, vector<16x256xf32>
    tpu.vector_store %arg6[%c48_109, %c0_110], %224 {strides = array<i32>} : memref<144x256xf32, #tpu.memory_space<vmem>>, vector<16x256xf32>,
    %c64_111 = arith.constant 64 : index
    %c0_112 = arith.constant 0 : index
    %226 = vector.load %arg6[%c64_111, %c0_112] : memref<144x256xf32, #tpu.memory_space<vmem>>, vector<16x256xf32>
    tpu.vector_store %arg6[%c64_111, %c0_112], %205 {strides = array<i32>} : memref<144x256xf32, #tpu.memory_space<vmem>>, vector<16x256xf32>,
    %c255_i32_113 = arith.constant 255 : i32
    %227 = tpu.dynamic_rotate %205 by %c255_i32_113 dim 1 : vector<16x256xf32>, i32 -> vector<16x256xf32>
    %228 = vector.extract_strided_slice %4 {offsets = [4, 0], sizes = [1, 256], strides = [1, 1]} : vector<8x256xf32> to vector<1x256xf32>
    %229 = vector.broadcast %228 : vector<1x256xf32> to vector<16x256xf32>
    %230 = arith.mulf %227, %229 : vector<16x256xf32>
    %c80_114 = arith.constant 80 : index
    %c0_115 = arith.constant 0 : index
    %231 = vector.load %arg6[%c80_114, %c0_115] : memref<144x256xf32, #tpu.memory_space<vmem>>, vector<16x256xf32>
    tpu.vector_store %arg6[%c80_114, %c0_115], %230 {strides = array<i32>} : memref<144x256xf32, #tpu.memory_space<vmem>>, vector<16x256xf32>,
    %c241_i32_116 = arith.constant 241 : i32
    %232 = tpu.dynamic_rotate %205 by %c241_i32_116 dim 1 : vector<16x256xf32>, i32 -> vector<16x256xf32>
    %233 = vector.extract_strided_slice %4 {offsets = [5, 0], sizes = [1, 256], strides = [1, 1]} : vector<8x256xf32> to vector<1x256xf32>
    %234 = vector.broadcast %233 : vector<1x256xf32> to vector<16x256xf32>
    %235 = arith.mulf %232, %234 : vector<16x256xf32>
    %c96_117 = arith.constant 96 : index
    %c0_118 = arith.constant 0 : index
    %236 = vector.load %arg6[%c96_117, %c0_118] : memref<144x256xf32, #tpu.memory_space<vmem>>, vector<16x256xf32>
    tpu.vector_store %arg6[%c96_117, %c0_118], %235 {strides = array<i32>} : memref<144x256xf32, #tpu.memory_space<vmem>>, vector<16x256xf32>,
    %c240_i32_119 = arith.constant 240 : i32
    %237 = tpu.dynamic_rotate %205 by %c240_i32_119 dim 1 : vector<16x256xf32>, i32 -> vector<16x256xf32>
    %238 = vector.extract_strided_slice %4 {offsets = [6, 0], sizes = [1, 256], strides = [1, 1]} : vector<8x256xf32> to vector<1x256xf32>
    %239 = vector.broadcast %238 : vector<1x256xf32> to vector<16x256xf32>
    %240 = arith.mulf %237, %239 : vector<16x256xf32>
    %c112_120 = arith.constant 112 : index
    %c0_121 = arith.constant 0 : index
    %241 = vector.load %arg6[%c112_120, %c0_121] : memref<144x256xf32, #tpu.memory_space<vmem>>, vector<16x256xf32>
    tpu.vector_store %arg6[%c112_120, %c0_121], %240 {strides = array<i32>} : memref<144x256xf32, #tpu.memory_space<vmem>>, vector<16x256xf32>,
    %c239_i32_122 = arith.constant 239 : i32
    %242 = tpu.dynamic_rotate %205 by %c239_i32_122 dim 1 : vector<16x256xf32>, i32 -> vector<16x256xf32>
    %243 = vector.extract_strided_slice %4 {offsets = [7, 0], sizes = [1, 256], strides = [1, 1]} : vector<8x256xf32> to vector<1x256xf32>
    %244 = vector.broadcast %243 : vector<1x256xf32> to vector<16x256xf32>
    %245 = arith.mulf %242, %244 : vector<16x256xf32>
    %c128_123 = arith.constant 128 : index
    %c0_124 = arith.constant 0 : index
    %246 = vector.load %arg6[%c128_123, %c0_124] : memref<144x256xf32, #tpu.memory_space<vmem>>, vector<16x256xf32>
    tpu.vector_store %arg6[%c128_123, %c0_124], %245 {strides = array<i32>} : memref<144x256xf32, #tpu.memory_space<vmem>>, vector<16x256xf32>,
    %c0_125 = arith.constant 0 : index
    %c0_126 = arith.constant 0 : index
    %247 = vector.load %arg6[%c0_125, %c0_126] : memref<144x256xf32, #tpu.memory_space<vmem>>, vector<144x256xf32>
    %cst_127 = arith.constant dense<0.000000e+00> : vector<16x256xf32>
    %248 = tpu.matmul %3, %247, %cst_127 {dimension_numbers = #tpu.dot_dimension_numbers<[1], [0], [0], [1], [0, 0, 1, 1], [], []>} : vector<16x144xf32>, vector<144x256xf32>, vector<16x256xf32> -> vector<16x256xf32>
    %249 = vector.broadcast %7 : vector<16x1xf32> to vector<16x256xf32>
    %250 = arith.addf %248, %249 : vector<16x256xf32>
    %cst_128 = arith.constant dense<0.000000e+00> : vector<16xf32>
    %251 = vector.multi_reduction <add>, %250, %cst_128 [1] : vector<16x256xf32> to vector<16xf32>
    %252 = vector.shape_cast %251 : vector<16xf32> to vector<16x1xf32>
    %cst_129 = arith.constant 2.560000e+02 : f32
    %253 = vector.broadcast %cst_129 : f32 to vector<16x1xf32>
    %254 = arith.divf %252, %253 : vector<16x1xf32>
    %255 = vector.broadcast %254 : vector<16x1xf32> to vector<16x2xf32>
    %256 = arith.mulf %8, %255 : vector<16x2xf32>
    %cst_130 = arith.constant dense<0.000000e+00> : vector<2xf32>
    %257 = vector.multi_reduction <add>, %256, %cst_130 [0] : vector<16x2xf32> to vector<2xf32>
    %258 = vector.shape_cast %257 : vector<2xf32> to vector<1x2xf32>
    %259 = arith.addf %258, %10 : vector<1x2xf32>
    %cst_131 = arith.constant 0.000000e+00 : f32
    %260 = vector.broadcast %cst_131 : f32 to vector<1x2xf32>
    %261 = arith.maximumf %259, %260 : vector<1x2xf32>
    %262 = vector.broadcast %261 : vector<1x2xf32> to vector<16x2xf32>
    %263 = arith.mulf %9, %262 : vector<16x2xf32>
    %cst_132 = arith.constant dense<0.000000e+00> : vector<16xf32>
    %264 = vector.multi_reduction <add>, %263, %cst_132 [1] : vector<16x2xf32> to vector<16xf32>
    %265 = vector.shape_cast %264 : vector<16xf32> to vector<16x1xf32>
    %266 = arith.addf %265, %11 : vector<16x1xf32>
    %267 = arith.negf %266 : vector<16x1xf32>
    %268 = math.exp %267 : vector<16x1xf32>
    %cst_133 = arith.constant 1.000000e+00 : f32
    %269 = vector.broadcast %cst_133 : f32 to vector<16x1xf32>
    %270 = arith.addf %269, %268 : vector<16x1xf32>
    %271 = arith.divf %269, %270 : vector<16x1xf32>
    %272 = vector.broadcast %271 : vector<16x1xf32> to vector<16x256xf32>
    %273 = arith.mulf %250, %272 : vector<16x256xf32>
    %cst_134 = arith.constant dense<0.000000e+00> : vector<2x256xf32>
    %274 = tpu.matmul %12, %273, %cst_134 {dimension_numbers = #tpu.dot_dimension_numbers<[1], [0], [0], [1], [0, 0, 1, 1], [], []>} : vector<2x16xf32>, vector<16x256xf32>, vector<2x256xf32> -> vector<2x256xf32>
    %275 = vector.broadcast %13 : vector<2x1xf32> to vector<2x256xf32>
    %276 = arith.addf %274, %275 : vector<2x256xf32>
    %cst_135 = arith.constant 0.000000e+00 : f32
    %277 = vector.broadcast %cst_135 : f32 to vector<2x256xf32>
    %278 = arith.maximumf %276, %277 : vector<2x256xf32>
    %279 = vector.broadcast %14 : vector<2x1xf32> to vector<2x256xf32>
    %280 = arith.mulf %278, %279 : vector<2x256xf32>
    %cst_136 = arith.constant dense<0.000000e+00> : vector<256xf32>
    %281 = vector.multi_reduction <add>, %280, %cst_136 [0] : vector<2x256xf32> to vector<256xf32>
    %282 = vector.shape_cast %281 : vector<256xf32> to vector<1x256xf32>
    %283 = vector.broadcast %15 : vector<1x1xf32> to vector<1x256xf32>
    %284 = arith.addf %282, %283 : vector<1x256xf32>
    %285 = arith.negf %284 : vector<1x256xf32>
    %286 = math.exp %285 : vector<1x256xf32>
    %cst_137 = arith.constant 1.000000e+00 : f32
    %287 = vector.broadcast %cst_137 : f32 to vector<1x256xf32>
    %288 = arith.addf %287, %286 : vector<1x256xf32>
    %289 = arith.divf %287, %288 : vector<1x256xf32>
    %290 = vector.broadcast %289 : vector<1x256xf32> to vector<16x256xf32>
    %291 = arith.mulf %273, %290 : vector<16x256xf32>
    %292 = arith.addf %291, %157 : vector<16x256xf32>
    %c1_138 = arith.constant 1 : index
    %c0_139 = arith.constant 0 : index
    %c0_140 = arith.constant 0 : index
    %293 = vector.load %arg5[%c1_138, %c0_139, %c0_140] : memref<2x16x256xf32, #tpu.memory_space<vmem>>, vector<1x16x256xf32>
    %294 = vector.shape_cast %293 : vector<1x16x256xf32> to vector<16x256xf32>
    %295 = vector.shape_cast %292 : vector<16x256xf32> to vector<1x16x256xf32>
    tpu.vector_store %arg5[%c1_138, %c0_139, %c0_140], %295 {strides = array<i32>} : memref<2x16x256xf32, #tpu.memory_space<vmem>>, vector<1x16x256xf32>,
    return
  }
  func.func @transform_0(%arg0: i32) -> (i32, i32, i32) {
    %c0_i32 = arith.constant 0 : i32
    %c0_i32_0 = arith.constant 0 : i32
    %c0_i32_1 = arith.constant 0 : i32
    return %arg0, %c0_i32, %c0_i32_0 : i32, i32, i32
  }
  func.func @transform_1(%arg0: i32) -> (i32, i32, i32) {
    %c0_i32 = arith.constant 0 : i32
    %c0_i32_0 = arith.constant 0 : i32
    %c0_i32_1 = arith.constant 0 : i32
    %c0_i32_2 = arith.constant 0 : i32
    return %c0_i32, %c0_i32_0, %c0_i32_1 : i32, i32, i32
  }
  func.func @transform_2(%arg0: i32) -> (i32, i32) {
    %c0_i32 = arith.constant 0 : i32
    %c0_i32_0 = arith.constant 0 : i32
    %c0_i32_1 = arith.constant 0 : i32
    return %c0_i32, %c0_i32_0 : i32, i32
  }
  func.func @transform_3(%arg0: i32) -> (i32, i32) {
    %c0_i32 = arith.constant 0 : i32
    %c0_i32_0 = arith.constant 0 : i32
    %c0_i32_1 = arith.constant 0 : i32
    return %c0_i32, %c0_i32_0 : i32, i32
  }
  func.func @transform_4(%arg0: i32) -> (i32, i32, i32) {
    %c0_i32 = arith.constant 0 : i32
    %c0_i32_0 = arith.constant 0 : i32
    %c0_i32_1 = arith.constant 0 : i32
    return %arg0, %c0_i32, %c0_i32_0 : i32, i32, i32
  }
}

</mosaic_0001>

<llo_original>
// kernel: tpu_custom_call.1
$region0: #{tpu_custom_call.1}
  #allocation0 [shape = 'u32[]', space=smem, size = 0x4, offset = 0x4, fixed_abs, tag = 'smem constant byte address 0x4 - core index']
  #allocation1 [shape = 'u32[144,128]{1,0:T(1,128)}', space=vmem, size = 0x12000, scoped, tag = 'internal scratch']
  #allocation2 [shape = 'f32[144,256]{1,0:T(8,128)}', space=vmem, size = 0x24000, scoped, tag = 'scratch operand']
  %s0 = inlined_call_operand.hbm [shape: f32[2,16,256], index: 0, kind: input, shape index: {}]
  %s1 = inlined_call_operand.hbm [shape: f32[2,16,144], index: 1, kind: input, shape index: {}]
  %s2 = inlined_call_operand.vmem [shape: f32[18,16], index: 2, kind: input, shape index: {}]
  %s3 = inlined_call_operand.vmem [shape: f32[8,256], index: 3, kind: input, shape index: {}]
  %s4 = inlined_call_operand.hbm [shape: f32[2,16,256], index: 4, kind: output, shape index: {}]
  %s5 = sld [smem:[#allocation0]]
  $region34: #{tpu_custom_call.1} parent=0
    _
  %s7 = ssub.s32 1, %s5
  %s8 = scalar_select 0, %s7, %s5
  $region1: #{tpu_custom_call.1} parent=0
    #allocation3 [shape = 'u8[32768]{0}', space=vmem, size = 0x8000, scoped, tag = 'input window, operand 0, single buffered']
    #allocation4 [shape = 's32[1]{0}', space=sflag, size = 0x4, scoped, tag = 'scoped memory for tpu_custom_call.1']
    #allocation5 [shape = 's32[1]{0}', space=sflag, size = 0x4, scoped, tag = 'scoped memory for tpu_custom_call.1']
    #allocation6 [shape = 'u8[32768]{0}', space=vmem, size = 0x8000, scoped, tag = 'input window, operand 1, single buffered']
    #allocation7 [shape = 's32[1]{0}', space=sflag, size = 0x4, scoped, tag = 'scoped memory for tpu_custom_call.1']
    #allocation8 [shape = 'u8[32768]{0}', space=vmem, size = 0x8000, scoped, tag = 'output window, operand 0, single buffered']
    %9 = vsyncpa [#allocation4], 0
    %10 = vsyncpa [#allocation7], 0
    %11 = vsyncpa [#allocation5], 0
    // Predicated region
    $region2: #{tpu_custom_call.1} parent=1 // pred_check
      _
    $region3: #{tpu_custom_call.1} parent=1 // pred_check_branch
      %13 = sbr.rel (0) target = $region5
    $region4: #{tpu_custom_call.1} parent=1 // pred_region
      %s15 = ssub.s32 1024, 1024
      %16 = vsyncadd [#allocation4], %s15
      %s17 = sshll.u32 [#allocation3], 4
      %s18 = int_to_ptr.vmem [resolvable:$true] %s17
      %23 = dma.hbm_to_vmem [thread:$0]  %s0, 1024, %s18, [#allocation4], 256, 256, 16
    $region5: #{tpu_custom_call.1} parent=1 // pred_fallthru
      _
    // Predicated region
    $region6: #{tpu_custom_call.1} parent=1 // pred_check
      _
    $region7: #{tpu_custom_call.1} parent=1 // pred_check_branch
      %25 = sbr.rel (0) target = $region9
    $region8: #{tpu_custom_call.1} parent=1 // pred_region
      %s27 = ssub.s32 1024, 1024
      %28 = vsyncadd [#allocation7], %s27
      %s29 = sshll.u32 [#allocation6], 4
      %s30 = int_to_ptr.vmem [resolvable:$true] %s29
      %35 = dma.hbm_to_vmem [thread:$0]  %s1, 1024, %s30, [#allocation7], 256, 256, 16
    $region9: #{tpu_custom_call.1} parent=1 // pred_fallthru
      _
    // Predicated region
    $region10: #{tpu_custom_call.1} parent=1 // pred_check
      _
    $region11: #{tpu_custom_call.1} parent=1 // pred_check_branch
      %37 = sbr.rel (0) target = $region13
    $region12: #{tpu_custom_call.1} parent=1 // pred_region
      _
    $region13: #{tpu_custom_call.1} parent=1 // pred_fallthru
      _
    // Predicated region
    $region14: #{tpu_custom_call.1} parent=1 // pred_check
      _
    $region15: #{tpu_custom_call.1} parent=1 // pred_check_branch
      %39 = sbr.rel (0) target = $region17
    $region16: #{tpu_custom_call.1} parent=1 // pred_region
      _
    $region17: #{tpu_custom_call.1} parent=1 // pred_fallthru
      _
    // Predicated region
    $region18: #{tpu_custom_call.1} parent=1 // pred_check
      _
    $region19: #{tpu_custom_call.1} parent=1 // pred_check_branch
      %41 = sbr.rel (0) target = $region21
    $region20: #{tpu_custom_call.1} parent=1 // pred_region
      %42 = dma.done [#allocation4], 1024
    $region21: #{tpu_custom_call.1} parent=1 // pred_fallthru
      _
    // Predicated region
    $region22: #{tpu_custom_call.1} parent=1 // pred_check
      _
    $region23: #{tpu_custom_call.1} parent=1 // pred_check_branch
      %44 = sbr.rel (0) target = $region25
    $region24: #{tpu_custom_call.1} parent=1 // pred_region
      %45 = dma.done [#allocation7], 1024
    $region25: #{tpu_custom_call.1} parent=1 // pred_fallthru
      _
    %v46 = vld [vmem:[#allocation6] sm:$0xff]
    %v47 = vld [vmem:[#allocation6 + $0x8] sm:$0xff]
    %v48 = vld [vmem:[#allocation6 + $0x10] sm:$0xff]
    %v49 = vld [vmem:[#allocation6 + $0x18] sm:$0xff]
    %s50 = scalar_lea.vmem [#allocation6], 32
    %v51 = vld [vmem:[%s50] sm:$0xff]
    %v52 = vld [vmem:[%s50 + $0x8] sm:$0xff]
    %v53 = vld [vmem:[%s50 + $0x10] sm:$0xff]
    %v54 = vld [vmem:[%s50 + $0x18] sm:$0xff]
    %v55 = vld [vmem:[%s3] sm:$0xff]
    %v56 = vld [vmem:[%s3 + $0x8] sm:$0xff]
    %v57 = vld [vmem:[%s2] sm:$0xff]
    %v58 = vld [vmem:[%s2 + $0x8] sm:$0xff]
    %v59 = vld [vmem:[%s2 + $0x10] sm:$0x3]
    %v60 = vld [vmem:[#allocation3] sm:$0xff]
    %v61 = vld [vmem:[#allocation3 + $0x8] sm:$0xff]
    %v62 = vld [vmem:[#allocation3 + $0x10] sm:$0xff]
    %v63 = vld [vmem:[#allocation3 + $0x18] sm:$0xff]
    %64 = vrot.lane.b32.xlu0 %v60, 17
    %v65 = vpop.permute.xlu0 %64
    %66 = vrot.lane.b32.xlu0 %v62, 17
    %v67 = vpop.permute.xlu0 %66
    %68 = vrot.lane.b32.xlu0 %v61, 17
    %v69 = vpop.permute.xlu0 %68
    %70 = vrot.lane.b32.xlu0 %v63, 17
    %v71 = vpop.permute.xlu0 %70
    %v72 = vlaneseq
    %v73 = vand.u32 %v72, 127
    %vm74 = vcmp.lt.s32.totalorder %v73, 17
    %v75 = vsel %vm74, %v65, %v69
    %v76 = vsel %vm74, %v67, %v71
    %v77 = vsel %vm74, %v69, %v65
    %v78 = vsel %vm74, %v71, %v67
    %v79 = vlaneseq
    %v80 = vshrl.u32 %v79, 7
    %v81 = vsub.s32 0, %v80
    %v82 = vrot.slane %v55, %v81
    %v83 = vlaneseq
    %v84 = vshrl.u32 %v83, 7
    %v85 = vsub.s32 0, %v84
    %v86 = vrot.slane %v56, %v85
    %v87 = vmul.f32 %v77, %v82
    %v88 = vmul.f32 %v75, %v86
    %v89 = vmul.f32 %v78, %v82
    %v90 = vmul.f32 %v76, %v86
    %91 = vst [vmem:[#allocation2] sm:$0xff] %v87
    %92 = vst [vmem:[#allocation2 + $0x8] sm:$0xff] %v88
    %93 = vst [vmem:[#allocation2 + $0x10] sm:$0xff] %v89
    %94 = vst [vmem:[#allocation2 + $0x18] sm:$0xff] %v90
    %95 = vrot.lane.b32.xlu0 %v60, 16
    %v96 = vpop.permute.xlu0 %95
    %97 = vrot.lane.b32.xlu0 %v62, 16
    %v98 = vpop.permute.xlu0 %97
    %99 = vrot.lane.b32.xlu0 %v61, 16
    %v100 = vpop.permute.xlu0 %99
    %101 = vrot.lane.b32.xlu0 %v63, 16
    %v102 = vpop.permute.xlu0 %101
    %vm103 = vcmp.lt.s32.totalorder %v73, 16
    %v104 = vsel %vm103, %v96, %v100
    %v105 = vsel %vm103, %v98, %v102
    %v106 = vsel %vm103, %v100, %v96
    %v107 = vsel %vm103, %v102, %v98
    %v108 = vlaneseq
    %v109 = vshrl.u32 %v108, 7
    %v110 = vsub.s32 1, %v109
    %v111 = vrot.slane %v55, %v110
    %v112 = vlaneseq
    %v113 = vshrl.u32 %v112, 7
    %v114 = vsub.s32 1, %v113
    %v115 = vrot.slane %v56, %v114
    %v116 = vmul.f32 %v106, %v111
    %v117 = vmul.f32 %v104, %v115
    %v118 = vmul.f32 %v107, %v111
    %v119 = vmul.f32 %v105, %v115
    %120 = vst [vmem:[#allocation2 + $0x20] sm:$0xff] %v116
    %121 = vst [vmem:[#allocation2 + $0x28] sm:$0xff] %v117
    %122 = vst [vmem:[#allocation2 + $0x30] sm:$0xff] %v118
    %123 = vst [vmem:[#allocation2 + $0x38] sm:$0xff] %v119
    %124 = vrot.lane.b32.xlu0 %v60, 15
    %v125 = vpop.permute.xlu0 %124
    %126 = vrot.lane.b32.xlu0 %v62, 15
    %v127 = vpop.permute.xlu0 %126
    %128 = vrot.lane.b32.xlu0 %v61, 15
    %v129 = vpop.permute.xlu0 %128
    %130 = vrot.lane.b32.xlu0 %v63, 15
    %v131 = vpop.permute.xlu0 %130
    %vm132 = vcmp.lt.s32.totalorder %v73, 15
    %v133 = vsel %vm132, %v125, %v129
    %v134 = vsel %vm132, %v127, %v131
    %v135 = vsel %vm132, %v129, %v125
    %v136 = vsel %vm132, %v131, %v127
    %v137 = vlaneseq
    %v138 = vshrl.u32 %v137, 7
    %v139 = vsub.s32 2, %v138
    %v140 = vrot.slane %v55, %v139
    %v141 = vlaneseq
    %v142 = vshrl.u32 %v141, 7
    %v143 = vsub.s32 2, %v142
    %v144 = vrot.slane %v56, %v143
    %v145 = vmul.f32 %v135, %v140
    %v146 = vmul.f32 %v133, %v144
    %v147 = vmul.f32 %v136, %v140
    %v148 = vmul.f32 %v134, %v144
    %149 = vst [vmem:[#allocation2 + $0x40] sm:$0xff] %v145
    %150 = vst [vmem:[#allocation2 + $0x48] sm:$0xff] %v146
    %151 = vst [vmem:[#allocation2 + $0x50] sm:$0xff] %v147
    %152 = vst [vmem:[#allocation2 + $0x58] sm:$0xff] %v148
    %153 = vrot.lane.b32.xlu0 %v60, 1
    %v154 = vpop.permute.xlu0 %153
    %155 = vrot.lane.b32.xlu0 %v62, 1
    %v156 = vpop.permute.xlu0 %155
    %157 = vrot.lane.b32.xlu0 %v61, 1
    %v158 = vpop.permute.xlu0 %157
    %159 = vrot.lane.b32.xlu0 %v63, 1
    %v160 = vpop.permute.xlu0 %159
    %vm161 = vcmp.lt.s32.totalorder %v73, 1
    %v162 = vsel %vm161, %v154, %v158
    %v163 = vsel %vm161, %v156, %v160
    %v164 = vsel %vm161, %v158, %v154
    %v165 = vsel %vm161, %v160, %v156
    %v166 = vlaneseq
    %v167 = vshrl.u32 %v166, 7
    %v168 = vsub.s32 3, %v167
    %v169 = vrot.slane %v55, %v168
    %v170 = vlaneseq
    %v171 = vshrl.u32 %v170, 7
    %v172 = vsub.s32 3, %v171
    %v173 = vrot.slane %v56, %v172
    %v174 = vmul.f32 %v164, %v169
    %v175 = vmul.f32 %v162, %v173
    %v176 = vmul.f32 %v165, %v169
    %v177 = vmul.f32 %v163, %v173
    %178 = vst [vmem:[#allocation2 + $0x60] sm:$0xff] %v174
    %179 = vst [vmem:[#allocation2 + $0x68] sm:$0xff] %v175
    %180 = vst [vmem:[#allocation2 + $0x70] sm:$0xff] %v176
    %181 = vst [vmem:[#allocation2 + $0x78] sm:$0xff] %v177
    %182 = vst [vmem:[#allocation2 + $0x80] sm:$0xff] %v60
    %183 = vst [vmem:[#allocation2 + $0x88] sm:$0xff] %v61
    %184 = vst [vmem:[#allocation2 + $0x90] sm:$0xff] %v62
    %185 = vst [vmem:[#allocation2 + $0x98] sm:$0xff] %v63
    %186 = vrot.lane.b32.xlu0 %v60, 127
    %v187 = vpop.permute.xlu0 %186
    %188 = vrot.lane.b32.xlu0 %v62, 127
    %v189 = vpop.permute.xlu0 %188
    %190 = vrot.lane.b32.xlu0 %v61, 127
    %v191 = vpop.permute.xlu0 %190
    %192 = vrot.lane.b32.xlu0 %v63, 127
    %v193 = vpop.permute.xlu0 %192
    %vm194 = vcmp.lt.s32.totalorder %v73, 127
    %v195 = vsel %vm194, %v187, %v191
    %v196 = vsel %vm194, %v189, %v193
    %v197 = vsel %vm194, %v191, %v187
    %v198 = vsel %vm194, %v193, %v189
    %v199 = vlaneseq
    %v200 = vshrl.u32 %v199, 7
    %v201 = vsub.s32 4, %v200
    %v202 = vrot.slane %v55, %v201
    %v203 = vlaneseq
    %v204 = vshrl.u32 %v203, 7
    %v205 = vsub.s32 4, %v204
    %v206 = vrot.slane %v56, %v205
    %v207 = vmul.f32 %v195, %v202
    %v208 = vmul.f32 %v197, %v206
    %v209 = vmul.f32 %v196, %v202
    %v210 = vmul.f32 %v198, %v206
    %211 = vst [vmem:[#allocation2 + $0xa0] sm:$0xff] %v207
    %212 = vst [vmem:[#allocation2 + $0xa8] sm:$0xff] %v208
    %213 = vst [vmem:[#allocation2 + $0xb0] sm:$0xff] %v209
    %214 = vst [vmem:[#allocation2 + $0xb8] sm:$0xff] %v210
    %215 = vrot.lane.b32.xlu0 %v60, 113
    %v216 = vpop.permute.xlu0 %215
    %217 = vrot.lane.b32.xlu0 %v62, 113
    %v218 = vpop.permute.xlu0 %217
    %219 = vrot.lane.b32.xlu0 %v61, 113
    %v220 = vpop.permute.xlu0 %219
    %221 = vrot.lane.b32.xlu0 %v63, 113
    %v222 = vpop.permute.xlu0 %221
    %vm223 = vcmp.lt.s32.totalorder %v73, 113
    %v224 = vsel %vm223, %v216, %v220
    %v225 = vsel %vm223, %v218, %v222
    %v226 = vsel %vm223, %v220, %v216
    %v227 = vsel %vm223, %v222, %v218
    %v228 = vlaneseq
    %v229 = vshrl.u32 %v228, 7
    %v230 = vsub.s32 5, %v229
    %v231 = vrot.slane %v55, %v230
    %v232 = vlaneseq
    %v233 = vshrl.u32 %v232, 7
    %v234 = vsub.s32 5, %v233
    %v235 = vrot.slane %v56, %v234
    %v236 = vmul.f32 %v224, %v231
    %v237 = vmul.f32 %v226, %v235
    %v238 = vmul.f32 %v225, %v231
    %v239 = vmul.f32 %v227, %v235
    %240 = vst [vmem:[#allocation2 + $0xc0] sm:$0xff] %v236
    %241 = vst [vmem:[#allocation2 + $0xc8] sm:$0xff] %v237
    %242 = vst [vmem:[#allocation2 + $0xd0] sm:$0xff] %v238
    %243 = vst [vmem:[#allocation2 + $0xd8] sm:$0xff] %v239
    %244 = vrot.lane.b32.xlu0 %v60, 112
    %v245 = vpop.permute.xlu0 %244
    %246 = vrot.lane.b32.xlu0 %v62, 112
    %v247 = vpop.permute.xlu0 %246
    %248 = vrot.lane.b32.xlu0 %v61, 112
    %v249 = vpop.permute.xlu0 %248
    %250 = vrot.lane.b32.xlu0 %v63, 112
    %v251 = vpop.permute.xlu0 %250
    %vm252 = vcmp.lt.s32.totalorder %v73, 112
    %v253 = vsel %vm252, %v245, %v249
    %v254 = vsel %vm252, %v247, %v251
    %v255 = vsel %vm252, %v249, %v245
    %v256 = vsel %vm252, %v251, %v247
    %v257 = vlaneseq
    %v258 = vshrl.u32 %v257, 7
    %v259 = vsub.s32 6, %v258
    %v260 = vrot.slane %v55, %v259
    %v261 = vlaneseq
    %v262 = vshrl.u32 %v261, 7
    %v263 = vsub.s32 6, %v262
    %v264 = vrot.slane %v56, %v263
    %v265 = vmul.f32 %v253, %v260
    %v266 = vmul.f32 %v255, %v264
    %v267 = vmul.f32 %v254, %v260
    %v268 = vmul.f32 %v256, %v264
    %269 = vst [vmem:[#allocation2 + $0xe0] sm:$0xff] %v265
    %270 = vst [vmem:[#allocation2 + $0xe8] sm:$0xff] %v266
    %271 = vst [vmem:[#allocation2 + $0xf0] sm:$0xff] %v267
    %272 = vst [vmem:[#allocation2 + $0xf8] sm:$0xff] %v268
    %273 = vrot.lane.b32.xlu0 %v60, 111
    %v274 = vpop.permute.xlu0 %273
    %275 = vrot.lane.b32.xlu0 %v62, 111
    %v276 = vpop.permute.xlu0 %275
    %277 = vrot.lane.b32.xlu0 %v61, 111
    %v278 = vpop.permute.xlu0 %277
    %279 = vrot.lane.b32.xlu0 %v63, 111
    %v280 = vpop.permute.xlu0 %279
    %vm281 = vcmp.lt.s32.totalorder %v73, 111
    %v282 = vsel %vm281, %v274, %v278
    %v283 = vsel %vm281, %v276, %v280
    %v284 = vsel %vm281, %v278, %v274
    %v285 = vsel %vm281, %v280, %v276
    %v286 = vlaneseq
    %v287 = vshrl.u32 %v286, 7
    %v288 = vsub.s32 7, %v287
    %v289 = vrot.slane %v55, %v288
    %v290 = vlaneseq
    %v291 = vshrl.u32 %v290, 7
    %v292 = vsub.s32 7, %v291
    %v293 = vrot.slane %v56, %v292
    %v294 = vmul.f32 %v282, %v289
    %v295 = vmul.f32 %v284, %v293
    %v296 = vmul.f32 %v283, %v289
    %v297 = vmul.f32 %v285, %v293
    %298 = vst [vmem:[#allocation2 + $0x100] sm:$0xff] %v294
    %299 = vst [vmem:[#allocation2 + $0x108] sm:$0xff] %v295
    %300 = vst [vmem:[#allocation2 + $0x110] sm:$0xff] %v296
    %301 = vst [vmem:[#allocation2 + $0x118] sm:$0xff] %v297
    %v302 = vld [vmem:[#allocation2] sm:$0xff]
    %v303 = vld [vmem:[#allocation2 + $0x8] sm:$0xff]
    %v304 = vld [vmem:[#allocation2 + $0x10] sm:$0xff]
    %v305 = vld [vmem:[#allocation2 + $0x18] sm:$0xff]
    %v306 = vld [vmem:[#allocation2 + $0x20] sm:$0xff]
    %v307 = vld [vmem:[#allocation2 + $0x28] sm:$0xff]
    %v308 = vld [vmem:[#allocation2 + $0x30] sm:$0xff]
    %v309 = vld [vmem:[#allocation2 + $0x38] sm:$0xff]
    %v310 = vld [vmem:[#allocation2 + $0x40] sm:$0xff]
    %v311 = vld [vmem:[#allocation2 + $0x48] sm:$0xff]
    %v312 = vld [vmem:[#allocation2 + $0x50] sm:$0xff]
    %v313 = vld [vmem:[#allocation2 + $0x58] sm:$0xff]
    %v314 = vld [vmem:[#allocation2 + $0x60] sm:$0xff]
    %v315 = vld [vmem:[#allocation2 + $0x68] sm:$0xff]
    %v316 = vld [vmem:[#allocation2 + $0x70] sm:$0xff]
    %v317 = vld [vmem:[#allocation2 + $0x78] sm:$0xff]
    %v318 = vld [vmem:[#allocation2 + $0x80] sm:$0xff]
    %v319 = vld [vmem:[#allocation2 + $0x88] sm:$0xff]
    %v320 = vld [vmem:[#allocation2 + $0x90] sm:$0xff]
    %v321 = vld [vmem:[#allocation2 + $0x98] sm:$0xff]
    %v322 = vld [vmem:[#allocation2 + $0xa0] sm:$0xff]
    %v323 = vld [vmem:[#allocation2 + $0xa8] sm:$0xff]
    %v324 = vld [vmem:[#allocation2 + $0xb0] sm:$0xff]
    %v325 = vld [vmem:[#allocation2 + $0xb8] sm:$0xff]
    %v326 = vld [vmem:[#allocation2 + $0xc0] sm:$0xff]
    %v327 = vld [vmem:[#allocation2 + $0xc8] sm:$0xff]
    %v328 = vld [vmem:[#allocation2 + $0xd0] sm:$0xff]
    %v329 = vld [vmem:[#allocation2 + $0xd8] sm:$0xff]
    %v330 = vld [vmem:[#allocation2 + $0xe0] sm:$0xff]
    %v331 = vld [vmem:[#allocation2 + $0xe8] sm:$0xff]
    %v332 = vld [vmem:[#allocation2 + $0xf0] sm:$0xff]
    %v333 = vld [vmem:[#allocation2 + $0xf8] sm:$0xff]
    %v334 = vld [vmem:[#allocation2 + $0x100] sm:$0xff]
    %v335 = vld [vmem:[#allocation2 + $0x108] sm:$0xff]
    %v336 = vld [vmem:[#allocation2 + $0x110] sm:$0xff]
    %v337 = vld [vmem:[#allocation2 + $0x118] sm:$0xff]
    %339 = vset.pattern.permute.xlu0 0
    %340 = vperm.xlu0 %339, %v57
    %v341 = vpop.permute.xlu0 %340
    %344 = vset.pattern.permute.xlu0 0
    %345 = vperm.xlu0 %344, %v58
    %v346 = vpop.permute.xlu0 %345
    %vm348 = vcmask 130048
    %v350 = vsel %vm348, %v47, 0
    %v353 = vsel %vm348, %v49, 0
    %355 = vmatprep.subr.mxu0 %v303
    %356 = vmatpush1.msra.mxu0 %v302
    %357 = vmatprep.subr.mxu0 %v305
    %358 = vmatpush1.msra.mxu0 %v304
    %359 = vmatprep.subr.mxu0 %v307
    %360 = vmatpush1.msra.mxu0 %v306
    %361 = vmatprep.subr.mxu0 %v309
    %362 = vmatpush1.msra.mxu0 %v308
    %363 = vmatprep.subr.mxu0 %v311
    %364 = vmatpush1.msra.mxu0 %v310
    %365 = vmatprep.subr.mxu0 %v313
    %366 = vmatpush1.msra.mxu0 %v312
    %367 = vmatprep.subr.mxu0 %v315
    %368 = vmatpush1.msra.mxu0 %v314
    %369 = vmatprep.subr.mxu0 %v317
    %370 = vmatpush1.msra.mxu0 %v316
    %371 = vmatprep.subr.mxu0 %v319
    %372 = vmatpush1.msra.mxu0 %v318
    %373 = vmatprep.subr.mxu0 %v321
    %374 = vmatpush1.msra.mxu0 %v320
    %375 = vmatprep.subr.mxu0 %v323
    %376 = vmatpush1.msra.mxu0 %v322
    %377 = vmatprep.subr.mxu0 %v325
    %378 = vmatpush1.msra.mxu0 %v324
    %379 = vmatprep.subr.mxu0 %v327
    %380 = vmatpush1.msra.mxu0 %v326
    %381 = vmatprep.subr.mxu0 %v329
    %382 = vmatpush1.msra.mxu0 %v328
    %383 = vmatprep.subr.mxu0 %v331
    %384 = vmatpush1.msra.mxu0 %v330
    %385 = vmatprep.subr.mxu0 %v333
    %386 = vmatpush1.msra.mxu0 %v332
    %387 = vmatprep.subr.mxu0 %v335
    %388 = vmatpush1.msra.mxu0 %v334
    %389 = vmatprep.subr.mxu0 %v337
    %390 = vmatpush1.msra.mxu0 %v336
    %391 = vmatprep.subr.mxu0 0.0
    %392 = vmatpush1.msra.mxu0 0.0
    %393 = vmatprep.subr.mxu0 0.0
    %394 = vmatpush1.msra.mxu0 0.0
    %395 = vmatprep.subr.mxu0 0.0
    %396 = vmatpush1.msra.mxu0 0.0
    %397 = vmatprep.subr.mxu0 0.0
    %398 = vmatpush1.msra.mxu0 0.0
    %399 = vmatprep.subr.mxu0 0.0
    %400 = vmatpush1.msra.mxu0 0.0
    %401 = vmatprep.subr.mxu0 0.0
    %402 = vmatpush1.msra.mxu0 0.0
    %403 = vmatprep.subr.mxu0 0.0
    %404 = vmatpush1.msra.mxu0 0.0
    %405 = vmatprep.subr.mxu0 0.0
    %406 = vmatpush1.msra.mxu0 0.0
    %407 = vmatprep.subr.mxu0 0.0
    %408 = vmatpush1.msra.mxu0 0.0
    %409 = vmatprep.subr.mxu0 0.0
    %410 = vmatpush1.msra.mxu0 0.0
    %411 = vmatprep.subr.mxu0 0.0
    %412 = vmatpush1.msra.mxu0 0.0
    %413 = vmatprep.subr.mxu0 0.0
    %414 = vmatpush1.msra.mxu0 0.0
    %415 = vmatprep.subr.mxu0 0.0
    %416 = vmatpush1.msra.mxu0 0.0
    %417 = vmatprep.subr.mxu0 0.0
    %418 = vmatpush1.msra.mxu0 0.0
    %419 = vmatprep.mubr.f32.mxu0 %v350
    %420 = vmatmul.mubr.f32.gmra.mrb[0].mxu0 %v46
    %v421 = vpop.f32.mrb[0].mxu0
    %v422 = vadd.f32 %v341, %v421
    %v423 = vpop.f32.mrb[0].mxu0
    %v424 = vadd.f32 %v341, %v423
    %425 = vmatprep.mubr.f32.mxu0 %v353
    %426 = vmatmul.mubr.f32.gmra.mrb[0].mxu0 %v48
    %v427 = vpop.f32.mrb[0].mxu0
    %v428 = vadd.f32 %v346, %v427
    %v429 = vpop.f32.mrb[0].mxu0
    %v430 = vadd.f32 %v346, %v429
    %431 = vdwg.mxu0
    %v432 = vmax.f32 %v422, 0.0
    %v433 = vmax.f32 %v424, 0.0
    %v434 = vmax.f32 %v428, 0.0
    %v435 = vmax.f32 %v430, 0.0
    %v436 = vadd.f32 %v432, %v60
    %v437 = vadd.f32 %v433, %v61
    %v438 = vadd.f32 %v434, %v62
    %v439 = vadd.f32 %v435, %v63
    %440 = vrot.lane.b32.xlu0 %v436, 17
    %v441 = vpop.permute.xlu0 %440
    %442 = vrot.lane.b32.xlu0 %v438, 17
    %v443 = vpop.permute.xlu0 %442
    %444 = vrot.lane.b32.xlu0 %v437, 17
    %v445 = vpop.permute.xlu0 %444
    %446 = vrot.lane.b32.xlu0 %v439, 17
    %v447 = vpop.permute.xlu0 %446
    %v448 = vsel %vm74, %v441, %v445
    %v449 = vsel %vm74, %v443, %v447
    %v450 = vsel %vm74, %v445, %v441
    %v451 = vsel %vm74, %v447, %v443
    %v452 = vmul.f32 %v450, %v82
    %v453 = vmul.f32 %v448, %v86
    %v454 = vmul.f32 %v451, %v82
    %v455 = vmul.f32 %v449, %v86
    %456 = vst [vmem:[#allocation2] sm:$0xff] %v452
    %457 = vst [vmem:[#allocation2 + $0x8] sm:$0xff] %v453
    %458 = vst [vmem:[#allocation2 + $0x10] sm:$0xff] %v454
    %459 = vst [vmem:[#allocation2 + $0x18] sm:$0xff] %v455
    %460 = vrot.lane.b32.xlu0 %v436, 16
    %v461 = vpop.permute.xlu0 %460
    %462 = vrot.lane.b32.xlu0 %v438, 16
    %v463 = vpop.permute.xlu0 %462
    %464 = vrot.lane.b32.xlu0 %v437, 16
    %v465 = vpop.permute.xlu0 %464
    %466 = vrot.lane.b32.xlu0 %v439, 16
    %v467 = vpop.permute.xlu0 %466
    %v468 = vsel %vm103, %v461, %v465
    %v469 = vsel %vm103, %v463, %v467
    %v470 = vsel %vm103, %v465, %v461
    %v471 = vsel %vm103, %v467, %v463
    %v472 = vmul.f32 %v470, %v111
    %v473 = vmul.f32 %v468, %v115
    %v474 = vmul.f32 %v471, %v111
    %v475 = vmul.f32 %v469, %v115
    %476 = vst [vmem:[#allocation2 + $0x20] sm:$0xff] %v472
    %477 = vst [vmem:[#allocation2 + $0x28] sm:$0xff] %v473
    %478 = vst [vmem:[#allocation2 + $0x30] sm:$0xff] %v474
    %479 = vst [vmem:[#allocation2 + $0x38] sm:$0xff] %v475
    %480 = vrot.lane.b32.xlu0 %v436, 15
    %v481 = vpop.permute.xlu0 %480
    %482 = vrot.lane.b32.xlu0 %v438, 15
    %v483 = vpop.permute.xlu0 %482
    %484 = vrot.lane.b32.xlu0 %v437, 15
    %v485 = vpop.permute.xlu0 %484
    %486 = vrot.lane.b32.xlu0 %v439, 15
    %v487 = vpop.permute.xlu0 %486
    %v488 = vsel %vm132, %v481, %v485
    %v489 = vsel %vm132, %v483, %v487
    %v490 = vsel %vm132, %v485, %v481
    %v491 = vsel %vm132, %v487, %v483
    %v492 = vmul.f32 %v490, %v140
    %v493 = vmul.f32 %v488, %v144
    %v494 = vmul.f32 %v491, %v140
    %v495 = vmul.f32 %v489, %v144
    %496 = vst [vmem:[#allocation2 + $0x40] sm:$0xff] %v492
    %497 = vst [vmem:[#allocation2 + $0x48] sm:$0xff] %v493
    %498 = vst [vmem:[#allocation2 + $0x50] sm:$0xff] %v494
    %499 = vst [vmem:[#allocation2 + $0x58] sm:$0xff] %v495
    %500 = vrot.lane.b32.xlu0 %v436, 1
    %v501 = vpop.permute.xlu0 %500
    %502 = vrot.lane.b32.xlu0 %v438, 1
    %v503 = vpop.permute.xlu0 %502
    %504 = vrot.lane.b32.xlu0 %v437, 1
    %v505 = vpop.permute.xlu0 %504
    %506 = vrot.lane.b32.xlu0 %v439, 1
    %v507 = vpop.permute.xlu0 %506
    %v508 = vsel %vm161, %v501, %v505
    %v509 = vsel %vm161, %v503, %v507
    %v510 = vsel %vm161, %v505, %v501
    %v511 = vsel %vm161, %v507, %v503
    %v512 = vmul.f32 %v510, %v169
    %v513 = vmul.f32 %v508, %v173
    %v514 = vmul.f32 %v511, %v169
    %v515 = vmul.f32 %v509, %v173
    %516 = vst [vmem:[#allocation2 + $0x60] sm:$0xff] %v512
    %517 = vst [vmem:[#allocation2 + $0x68] sm:$0xff] %v513
    %518 = vst [vmem:[#allocation2 + $0x70] sm:$0xff] %v514
    %519 = vst [vmem:[#allocation2 + $0x78] sm:$0xff] %v515
    %520 = vst [vmem:[#allocation2 + $0x80] sm:$0xff] %v436
    %521 = vst [vmem:[#allocation2 + $0x88] sm:$0xff] %v437
    %522 = vst [vmem:[#allocation2 + $0x90] sm:$0xff] %v438
    %523 = vst [vmem:[#allocation2 + $0x98] sm:$0xff] %v439
    %524 = vrot.lane.b32.xlu0 %v436, 127
    %v525 = vpop.permute.xlu0 %524
    %526 = vrot.lane.b32.xlu0 %v438, 127
    %v527 = vpop.permute.xlu0 %526
    %528 = vrot.lane.b32.xlu0 %v437, 127
    %v529 = vpop.permute.xlu0 %528
    %530 = vrot.lane.b32.xlu0 %v439, 127
    %v531 = vpop.permute.xlu0 %530
    %v532 = vsel %vm194, %v525, %v529
    %v533 = vsel %vm194, %v527, %v531
    %v534 = vsel %vm194, %v529, %v525
    %v535 = vsel %vm194, %v531, %v527
    %v536 = vmul.f32 %v532, %v202
    %v537 = vmul.f32 %v534, %v206
    %v538 = vmul.f32 %v533, %v202
    %v539 = vmul.f32 %v535, %v206
    %540 = vst [vmem:[#allocation2 + $0xa0] sm:$0xff] %v536
    %541 = vst [vmem:[#allocation2 + $0xa8] sm:$0xff] %v537
    %542 = vst [vmem:[#allocation2 + $0xb0] sm:$0xff] %v538
    %543 = vst [vmem:[#allocation2 + $0xb8] sm:$0xff] %v539
    %544 = vrot.lane.b32.xlu0 %v436, 113
    %v545 = vpop.permute.xlu0 %544
    %546 = vrot.lane.b32.xlu0 %v438, 113
    %v547 = vpop.permute.xlu0 %546
    %548 = vrot.lane.b32.xlu0 %v437, 113
    %v549 = vpop.permute.xlu0 %548
    %550 = vrot.lane.b32.xlu0 %v439, 113
    %v551 = vpop.permute.xlu0 %550
    %v552 = vsel %vm223, %v545, %v549
    %v553 = vsel %vm223, %v547, %v551
    %v554 = vsel %vm223, %v549, %v545
    %v555 = vsel %vm223, %v551, %v547
    %v556 = vmul.f32 %v552, %v231
    %v557 = vmul.f32 %v554, %v235
    %v558 = vmul.f32 %v553, %v231
    %v559 = vmul.f32 %v555, %v235
    %560 = vst [vmem:[#allocation2 + $0xc0] sm:$0xff] %v556
    %561 = vst [vmem:[#allocation2 + $0xc8] sm:$0xff] %v557
    %562 = vst [vmem:[#allocation2 + $0xd0] sm:$0xff] %v558
    %563 = vst [vmem:[#allocation2 + $0xd8] sm:$0xff] %v559
    %564 = vrot.lane.b32.xlu0 %v436, 112
    %v565 = vpop.permute.xlu0 %564
    %566 = vrot.lane.b32.xlu0 %v438, 112
    %v567 = vpop.permute.xlu0 %566
    %568 = vrot.lane.b32.xlu0 %v437, 112
    %v569 = vpop.permute.xlu0 %568
    %570 = vrot.lane.b32.xlu0 %v439, 112
    %v571 = vpop.permute.xlu0 %570
    %v572 = vsel %vm252, %v565, %v569
    %v573 = vsel %vm252, %v567, %v571
    %v574 = vsel %vm252, %v569, %v565
    %v575 = vsel %vm252, %v571, %v567
    %v576 = vmul.f32 %v572, %v260
    %v577 = vmul.f32 %v574, %v264
    %v578 = vmul.f32 %v573, %v260
    %v579 = vmul.f32 %v575, %v264
    %580 = vst [vmem:[#allocation2 + $0xe0] sm:$0xff] %v576
    %581 = vst [vmem:[#allocation2 + $0xe8] sm:$0xff] %v577
    %582 = vst [vmem:[#allocation2 + $0xf0] sm:$0xff] %v578
    %583 = vst [vmem:[#allocation2 + $0xf8] sm:$0xff] %v579
    %584 = vrot.lane.b32.xlu0 %v436, 111
    %v585 = vpop.permute.xlu0 %584
    %586 = vrot.lane.b32.xlu0 %v438, 111
    %v587 = vpop.permute.xlu0 %586
    %588 = vrot.lane.b32.xlu0 %v437, 111
    %v589 = vpop.permute.xlu0 %588
    %590 = vrot.lane.b32.xlu0 %v439, 111
    %v591 = vpop.permute.xlu0 %590
    %v592 = vsel %vm281, %v585, %v589
    %v593 = vsel %vm281, %v587, %v591
    %v594 = vsel %vm281, %v589, %v585
    %v595 = vsel %vm281, %v591, %v587
    %v596 = vmul.f32 %v592, %v289
    %v597 = vmul.f32 %v594, %v293
    %v598 = vmul.f32 %v593, %v289
    %v599 = vmul.f32 %v595, %v293
    %600 = vst [vmem:[#allocation2 + $0x100] sm:$0xff] %v596
    %601 = vst [vmem:[#allocation2 + $0x108] sm:$0xff] %v597
    %602 = vst [vmem:[#allocation2 + $0x110] sm:$0xff] %v598
    %603 = vst [vmem:[#allocation2 + $0x118] sm:$0xff] %v599
    %v604 = vld [vmem:[#allocation2] sm:$0xff]
    %v605 = vld [vmem:[#allocation2 + $0x8] sm:$0xff]
    %v606 = vld [vmem:[#allocation2 + $0x10] sm:$0xff]
    %v607 = vld [vmem:[#allocation2 + $0x18] sm:$0xff]
    %v608 = vld [vmem:[#allocation2 + $0x20] sm:$0xff]
    %v609 = vld [vmem:[#allocation2 + $0x28] sm:$0xff]
    %v610 = vld [vmem:[#allocation2 + $0x30] sm:$0xff]
    %v611 = vld [vmem:[#allocation2 + $0x38] sm:$0xff]
    %v612 = vld [vmem:[#allocation2 + $0x40] sm:$0xff]
    %v613 = vld [vmem:[#allocation2 + $0x48] sm:$0xff]
    %v614 = vld [vmem:[#allocation2 + $0x50] sm:$0xff]
    %v615 = vld [vmem:[#allocation2 + $0x58] sm:$0xff]
    %v616 = vld [vmem:[#allocation2 + $0x60] sm:$0xff]
    %v617 = vld [vmem:[#allocation2 + $0x68] sm:$0xff]
    %v618 = vld [vmem:[#allocation2 + $0x70] sm:$0xff]
    %v619 = vld [vmem:[#allocation2 + $0x78] sm:$0xff]
    %v620 = vld [vmem:[#allocation2 + $0x80] sm:$0xff]
    %v621 = vld [vmem:[#allocation2 + $0x88] sm:$0xff]
    %v622 = vld [vmem:[#allocation2 + $0x90] sm:$0xff]
    %v623 = vld [vmem:[#allocation2 + $0x98] sm:$0xff]
    %v624 = vld [vmem:[#allocation2 + $0xa0] sm:$0xff]
    %v625 = vld [vmem:[#allocation2 + $0xa8] sm:$0xff]
    %v626 = vld [vmem:[#allocation2 + $0xb0] sm:$0xff]
    %v627 = vld [vmem:[#allocation2 + $0xb8] sm:$0xff]
    %v628 = vld [vmem:[#allocation2 + $0xc0] sm:$0xff]
    %v629 = vld [vmem:[#allocation2 + $0xc8] sm:$0xff]
    %v630 = vld [vmem:[#allocation2 + $0xd0] sm:$0xff]
    %v631 = vld [vmem:[#allocation2 + $0xd8] sm:$0xff]
    %v632 = vld [vmem:[#allocation2 + $0xe0] sm:$0xff]
    %v633 = vld [vmem:[#allocation2 + $0xe8] sm:$0xff]
    %v634 = vld [vmem:[#allocation2 + $0xf0] sm:$0xff]
    %v635 = vld [vmem:[#allocation2 + $0xf8] sm:$0xff]
    %v636 = vld [vmem:[#allocation2 + $0x100] sm:$0xff]
    %v637 = vld [vmem:[#allocation2 + $0x108] sm:$0xff]
    %v638 = vld [vmem:[#allocation2 + $0x110] sm:$0xff]
    %v639 = vld [vmem:[#allocation2 + $0x118] sm:$0xff]
    %640 = vset.pattern.permute.xlu0 1
    %641 = vperm.xlu0 %640, %v57
    %v642 = vpop.permute.xlu0 %641
    %644 = vset.pattern.permute.xlu0 1
    %645 = vperm.xlu0 %644, %v58
    %v646 = vpop.permute.xlu0 %645
    %v649 = vsel %vm348, %v52, 0
    %v652 = vsel %vm348, %v54, 0
    %654 = vmatprep.subr.mxu0 %v605
    %655 = vmatpush1.msra.mxu0 %v604
    %656 = vmatprep.subr.mxu0 %v607
    %657 = vmatpush1.msra.mxu0 %v606
    %658 = vmatprep.subr.mxu0 %v609
    %659 = vmatpush1.msra.mxu0 %v608
    %660 = vmatprep.subr.mxu0 %v611
    %661 = vmatpush1.msra.mxu0 %v610
    %662 = vmatprep.subr.mxu0 %v613
    %663 = vmatpush1.msra.mxu0 %v612
    %664 = vmatprep.subr.mxu0 %v615
    %665 = vmatpush1.msra.mxu0 %v614
    %666 = vmatprep.subr.mxu0 %v617
    %667 = vmatpush1.msra.mxu0 %v616
    %668 = vmatprep.subr.mxu0 %v619
    %669 = vmatpush1.msra.mxu0 %v618
    %670 = vmatprep.subr.mxu0 %v621
    %671 = vmatpush1.msra.mxu0 %v620
    %672 = vmatprep.subr.mxu0 %v623
    %673 = vmatpush1.msra.mxu0 %v622
    %674 = vmatprep.subr.mxu0 %v625
    %675 = vmatpush1.msra.mxu0 %v624
    %676 = vmatprep.subr.mxu0 %v627
    %677 = vmatpush1.msra.mxu0 %v626
    %678 = vmatprep.subr.mxu0 %v629
    %679 = vmatpush1.msra.mxu0 %v628
    %680 = vmatprep.subr.mxu0 %v631
    %681 = vmatpush1.msra.mxu0 %v630
    %682 = vmatprep.subr.mxu0 %v633
    %683 = vmatpush1.msra.mxu0 %v632
    %684 = vmatprep.subr.mxu0 %v635
    %685 = vmatpush1.msra.mxu0 %v634
    %686 = vmatprep.subr.mxu0 %v637
    %687 = vmatpush1.msra.mxu0 %v636
    %688 = vmatprep.subr.mxu0 %v639
    %689 = vmatpush1.msra.mxu0 %v638
    %690 = vmatprep.subr.mxu0 0.0
    %691 = vmatpush1.msra.mxu0 0.0
    %692 = vmatprep.subr.mxu0 0.0
    %693 = vmatpush1.msra.mxu0 0.0
    %694 = vmatprep.subr.mxu0 0.0
    %695 = vmatpush1.msra.mxu0 0.0
    %696 = vmatprep.subr.mxu0 0.0
    %697 = vmatpush1.msra.mxu0 0.0
    %698 = vmatprep.subr.mxu0 0.0
    %699 = vmatpush1.msra.mxu0 0.0
    %700 = vmatprep.subr.mxu0 0.0
    %701 = vmatpush1.msra.mxu0 0.0
    %702 = vmatprep.subr.mxu0 0.0
    %703 = vmatpush1.msra.mxu0 0.0
    %704 = vmatprep.subr.mxu0 0.0
    %705 = vmatpush1.msra.mxu0 0.0
    %706 = vmatprep.subr.mxu0 0.0
    %707 = vmatpush1.msra.mxu0 0.0
    %708 = vmatprep.subr.mxu0 0.0
    %709 = vmatpush1.msra.mxu0 0.0
    %710 = vmatprep.subr.mxu0 0.0
    %711 = vmatpush1.msra.mxu0 0.0
    %712 = vmatprep.subr.mxu0 0.0
    %713 = vmatpush1.msra.mxu0 0.0
    %714 = vmatprep.subr.mxu0 0.0
    %715 = vmatpush1.msra.mxu0 0.0
    %716 = vmatprep.subr.mxu0 0.0
    %717 = vmatpush1.msra.mxu0 0.0
    %718 = vmatprep.mubr.f32.mxu0 %v649
    %719 = vmatmul.mubr.f32.gmra.mrb[0].mxu0 %v51
    %v720 = vpop.f32.mrb[0].mxu0
    %v721 = vadd.f32 %v642, %v720
    %v722 = vpop.f32.mrb[0].mxu0
    %v723 = vadd.f32 %v642, %v722
    %724 = vmatprep.mubr.f32.mxu0 %v652
    %725 = vmatmul.mubr.f32.gmra.mrb[0].mxu0 %v53
    %v726 = vpop.f32.mrb[0].mxu0
    %v727 = vadd.f32 %v646, %v726
    %v728 = vpop.f32.mrb[0].mxu0
    %v729 = vadd.f32 %v646, %v728
    %730 = vdwg.mxu0
    %v731 = vadd.f32 %v721, %v723
    %732 = vadd.xlane.f32.xlu0 %v731
    %v733 = vpop.xlane.xlu0 %732
    %v734 = vadd.f32 %v727, %v729
    %735 = vadd.xlane.f32.xlu0 %v734
    %v736 = vpop.xlane.xlu0 %735
    %v737 = vrcp.pop 256.0
    %v738 = vmul.f32 %v733, %v737
    %v739 = vmul.f32 %v736, %v737
    %v740 = vmul.f32 %v57, %v738
    %v741 = vmul.f32 %v58, %v739
    %vm742 = vcmask 39960
    %v743 = vsel %vm742, %v740, 0.0
    %v744 = vsel %vm742, %v741, 0.0
    %v745 = vadd.f32 %v743, %v744
    %v746 = vrot.slane %v745, 4
    %v747 = vadd.f32 %v745, %v746
    %v748 = vrot.slane %v747, 2
    %v749 = vadd.f32 %v747, %v748
    %v750 = vrot.slane %v749, 1
    %v751 = vadd.f32 %v749, %v750
    %752 = vrot.lane.b32.xlu0 %v57, 121
    %v753 = vpop.permute.xlu0 %752
    %v755 = vadd.f32 %v751, %v753
    %v756 = vmax.f32 %v755, 0.0
    %v757 = vlaneseq
    %v758 = vshrl.u32 %v757, 7
    %v759 = vsub.s32 0, %v758
    %v760 = vrot.slane %v756, %v759
    %762 = vrot.lane.b32.xlu0 %v760, 2
    %v763 = vpop.permute.xlu0 %762
    %v765 = vmul.f32 %v57, %v763
    %v766 = vmul.f32 %v58, %v763
    %769 = vrot.lane.b32.xlu0 %v765, 123
    %v770 = vpop.permute.xlu0 %769
    %771 = vrot.lane.b32.xlu0 %v766, 123
    %v772 = vpop.permute.xlu0 %771
    %vm775 = vcmask 15360
    %v776 = vsel %vm775, %v770, 0.0
    %777 = vadd.xlane.f32.xlu0 %v776
    %v778 = vpop.xlane.xlu0 %777
    %v779 = vsel %vm775, %v772, 0.0
    %780 = vadd.xlane.f32.xlu0 %v779
    %v781 = vpop.xlane.xlu0 %780
    %v782 = vadd.f32 %v778, %v57
    %v783 = vadd.f32 %v781, %v58
    %v784 = vxor.u32 %v782, 2147483648
    %v785 = vxor.u32 %v783, 2147483648
    %v786 = vmul.f32 %v784, 1.442695
    %v787 = vpow.pop %v786
    %v788 = vmul.f32 %v785, 1.442695
    %v789 = vpow.pop %v788
    %v790 = vadd.f32 %v787, 1.0
    %v791 = vadd.f32 %v789, 1.0
    %v792 = vrcp.pop %v790
    %v793 = vmul.f32 1.0, %v792
    %v794 = vrcp.pop %v791
    %v795 = vmul.f32 1.0, %v794
    %797 = vset.pattern.permute.xlu0 2
    %798 = vperm.xlu0 %797, %v793
    %v799 = vpop.permute.xlu0 %798
    %802 = vset.pattern.permute.xlu0 2
    %803 = vperm.xlu0 %802, %v795
    %v804 = vpop.permute.xlu0 %803
    %v806 = vmul.f32 %v721, %v799
    %v807 = vmul.f32 %v723, %v799
    %v808 = vmul.f32 %v727, %v804
    %v809 = vmul.f32 %v729, %v804
    %810 = vset.pattern.permute.xlu0 7
    %811 = vperm.xlu0 %810, %v57
    %v812 = vpop.permute.xlu0 %811
    %v815 = vsel %vm348, %v59, 0
    %817 = vmatprep.subr.mxu0 %v807
    %818 = vmatpush1.msra.mxu0 %v806
    %819 = vmatprep.subr.mxu0 %v809
    %820 = vmatpush1.msra.mxu0 %v808
    %821 = vmatprep.subr.mxu0 0.0
    %822 = vmatpush1.msra.mxu0 0.0
    %823 = vmatprep.subr.mxu0 0.0
    %824 = vmatpush1.msra.mxu0 0.0
    %825 = vmatprep.subr.mxu0 0.0
    %826 = vmatpush1.msra.mxu0 0.0
    %827 = vmatprep.subr.mxu0 0.0
    %828 = vmatpush1.msra.mxu0 0.0
    %829 = vmatprep.subr.mxu0 0.0
    %830 = vmatpush1.msra.mxu0 0.0
    %831 = vmatprep.subr.mxu0 0.0
    %832 = vmatpush1.msra.mxu0 0.0
    %833 = vmatprep.subr.mxu0 0.0
    %834 = vmatpush1.msra.mxu0 0.0
    %835 = vmatprep.subr.mxu0 0.0
    %836 = vmatpush1.msra.mxu0 0.0
    %837 = vmatprep.subr.mxu0 0.0
    %838 = vmatpush1.msra.mxu0 0.0
    %839 = vmatprep.subr.mxu0 0.0
    %840 = vmatpush1.msra.mxu0 0.0
    %841 = vmatprep.subr.mxu0 0.0
    %842 = vmatpush1.msra.mxu0 0.0
    %843 = vmatprep.subr.mxu0 0.0
    %844 = vmatpush1.msra.mxu0 0.0
    %845 = vmatprep.subr.mxu0 0.0
    %846 = vmatpush1.msra.mxu0 0.0
    %847 = vmatprep.subr.mxu0 0.0
    %848 = vmatpush1.msra.mxu0 0.0
    %849 = vmatprep.subr.mxu0 0.0
    %850 = vmatpush1.msra.mxu0 0.0
    %851 = vmatprep.subr.mxu0 0.0
    %852 = vmatpush1.msra.mxu0 0.0
    %853 = vmatprep.subr.mxu0 0.0
    %854 = vmatpush1.msra.mxu0 0.0
    %855 = vmatprep.subr.mxu0 0.0
    %856 = vmatpush1.msra.mxu0 0.0
    %857 = vmatprep.subr.mxu0 0.0
    %858 = vmatpush1.msra.mxu0 0.0
    %859 = vmatprep.subr.mxu0 0.0
    %860 = vmatpush1.msra.mxu0 0.0
    %861 = vmatprep.subr.mxu0 0.0
    %862 = vmatpush1.msra.mxu0 0.0
    %863 = vmatprep.subr.mxu0 0.0
    %864 = vmatpush1.msra.mxu0 0.0
    %865 = vmatprep.subr.mxu0 0.0
    %866 = vmatpush1.msra.mxu0 0.0
    %867 = vmatprep.subr.mxu0 0.0
    %868 = vmatpush1.msra.mxu0 0.0
    %869 = vmatprep.subr.mxu0 0.0
    %870 = vmatpush1.msra.mxu0 0.0
    %871 = vmatprep.subr.mxu0 0.0
    %872 = vmatpush1.msra.mxu0 0.0
    %873 = vmatprep.subr.mxu0 0.0
    %874 = vmatpush1.msra.mxu0 0.0
    %875 = vmatprep.subr.mxu0 0.0
    %876 = vmatpush1.msra.mxu0 0.0
    %877 = vmatprep.subr.mxu0 0.0
    %878 = vmatpush1.msra.mxu0 0.0
    %879 = vmatprep.subr.mxu0 0.0
    %880 = vmatpush1.msra.mxu0 0.0
    %881 = vmatprep.mubr.f32.mxu0 0.0
    %882 = vmatmul.mubr.f32.gmra.mrb[0].mxu0 %v815
    %v883 = vpop.f32.mrb[0].mxu0
    %v884 = vadd.f32 %v812, %v883
    %v885 = vpop.f32.mrb[0].mxu0
    %v886 = vadd.f32 %v812, %v885
    %887 = vdwg.mxu0
    %v888 = vmax.f32 %v884, 0.0
    %v889 = vmax.f32 %v886, 0.0
    %890 = vset.pattern.permute.xlu0 8
    %891 = vperm.xlu0 %890, %v57
    %v892 = vpop.permute.xlu0 %891
    %v894 = vmul.f32 %v888, %v892
    %v895 = vmul.f32 %v889, %v892
    %vm896 = vcmask 1041408
    %v897 = vsel %vm896, %v894, 0.0
    %v898 = vrot.slane %v897, 4
    %v899 = vadd.f32 %v897, %v898
    %v900 = vrot.slane %v899, 2
    %v901 = vadd.f32 %v899, %v900
    %v902 = vrot.slane %v901, 1
    %v903 = vadd.f32 %v901, %v902
    %v904 = vsel %vm896, %v895, 0.0
    %v905 = vrot.slane %v904, 4
    %v906 = vadd.f32 %v904, %v905
    %v907 = vrot.slane %v906, 2
    %v908 = vadd.f32 %v906, %v907
    %v909 = vrot.slane %v908, 1
    %v910 = vadd.f32 %v908, %v909
    %911 = vset.pattern.permute.xlu0 9
    %912 = vperm.xlu0 %911, %v57
    %v913 = vpop.permute.xlu0 %912
    %v915 = vadd.f32 %v903, %v913
    %v916 = vadd.f32 %v910, %v913
    %v917 = vxor.u32 %v915, 2147483648
    %v918 = vxor.u32 %v916, 2147483648
    %v919 = vmul.f32 %v917, 1.442695
    %v920 = vpow.pop %v919
    %v921 = vmul.f32 %v918, 1.442695
    %v922 = vpow.pop %v921
    %v923 = vadd.f32 %v920, 1.0
    %v924 = vadd.f32 %v922, 1.0
    %v925 = vrcp.pop %v923
    %v926 = vmul.f32 1.0, %v925
    %v927 = vrcp.pop %v924
    %v928 = vmul.f32 1.0, %v927
    %v929 = vlaneseq
    %v930 = vshrl.u32 %v929, 7
    %v931 = vsub.s32 0, %v930
    %v932 = vrot.slane %v926, %v931
    %v933 = vlaneseq
    %v934 = vshrl.u32 %v933, 7
    %v935 = vsub.s32 0, %v934
    %v936 = vrot.slane %v928, %v935
    %v937 = vmul.f32 %v806, %v932
    %v938 = vmul.f32 %v807, %v936
    %v939 = vmul.f32 %v808, %v932
    %v940 = vmul.f32 %v809, %v936
    %v941 = vadd.f32 %v937, %v60
    %v942 = vadd.f32 %v938, %v61
    %v943 = vadd.f32 %v939, %v62
    %v944 = vadd.f32 %v940, %v63
    %945 = vst [vmem:[#allocation8] sm:$0xff] %v941
    %946 = vst [vmem:[#allocation8 + $0x8] sm:$0xff] %v942
    %947 = vst [vmem:[#allocation8 + $0x10] sm:$0xff] %v943
    %948 = vst [vmem:[#allocation8 + $0x18] sm:$0xff] %v944
    %s949 = scalar_lea.vmem [#allocation3], 32
    %v950 = vld [vmem:[%s949] sm:$0xff]
    %v951 = vld [vmem:[%s949 + $0x8] sm:$0xff]
    %v952 = vld [vmem:[%s949 + $0x10] sm:$0xff]
    %v953 = vld [vmem:[%s949 + $0x18] sm:$0xff]
    %954 = vrot.lane.b32.xlu0 %v950, 17
    %v955 = vpop.permute.xlu0 %954
    %956 = vrot.lane.b32.xlu0 %v952, 17
    %v957 = vpop.permute.xlu0 %956
    %958 = vrot.lane.b32.xlu0 %v951, 17
    %v959 = vpop.permute.xlu0 %958
    %960 = vrot.lane.b32.xlu0 %v953, 17
    %v961 = vpop.permute.xlu0 %960
    %v962 = vsel %vm74, %v955, %v959
    %v963 = vsel %vm74, %v957, %v961
    %v964 = vsel %vm74, %v959, %v955
    %v965 = vsel %vm74, %v961, %v957
    %v966 = vmul.f32 %v964, %v82
    %v967 = vmul.f32 %v962, %v86
    %v968 = vmul.f32 %v965, %v82
    %v969 = vmul.f32 %v963, %v86
    %970 = vst [vmem:[#allocation2] sm:$0xff] %v966
    %971 = vst [vmem:[#allocation2 + $0x8] sm:$0xff] %v967
    %972 = vst [vmem:[#allocation2 + $0x10] sm:$0xff] %v968
    %973 = vst [vmem:[#allocation2 + $0x18] sm:$0xff] %v969
    %974 = vrot.lane.b32.xlu0 %v950, 16
    %v975 = vpop.permute.xlu0 %974
    %976 = vrot.lane.b32.xlu0 %v952, 16
    %v977 = vpop.permute.xlu0 %976
    %978 = vrot.lane.b32.xlu0 %v951, 16
    %v979 = vpop.permute.xlu0 %978
    %980 = vrot.lane.b32.xlu0 %v953, 16
    %v981 = vpop.permute.xlu0 %980
    %v982 = vsel %vm103, %v975, %v979
    %v983 = vsel %vm103, %v977, %v981
    %v984 = vsel %vm103, %v979, %v975
    %v985 = vsel %vm103, %v981, %v977
    %v986 = vmul.f32 %v984, %v111
    %v987 = vmul.f32 %v982, %v115
    %v988 = vmul.f32 %v985, %v111
    %v989 = vmul.f32 %v983, %v115
    %990 = vst [vmem:[#allocation2 + $0x20] sm:$0xff] %v986
    %991 = vst [vmem:[#allocation2 + $0x28] sm:$0xff] %v987
    %992 = vst [vmem:[#allocation2 + $0x30] sm:$0xff] %v988
    %993 = vst [vmem:[#allocation2 + $0x38] sm:$0xff] %v989
    %994 = vrot.lane.b32.xlu0 %v950, 15
    %v995 = vpop.permute.xlu0 %994
    %996 = vrot.lane.b32.xlu0 %v952, 15
    %v997 = vpop.permute.xlu0 %996
    %998 = vrot.lane.b32.xlu0 %v951, 15
    %v999 = vpop.permute.xlu0 %998
    %1000 = vrot.lane.b32.xlu0 %v953, 15
    %v1001 = vpop.permute.xlu0 %1000
    %v1002 = vsel %vm132, %v995, %v999
    %v1003 = vsel %vm132, %v997, %v1001
    %v1004 = vsel %vm132, %v999, %v995
    %v1005 = vsel %vm132, %v1001, %v997
    %v1006 = vmul.f32 %v1004, %v140
    %v1007 = vmul.f32 %v1002, %v144
    %v1008 = vmul.f32 %v1005, %v140
    %v1009 = vmul.f32 %v1003, %v144
    %1010 = vst [vmem:[#allocation2 + $0x40] sm:$0xff] %v1006
    %1011 = vst [vmem:[#allocation2 + $0x48] sm:$0xff] %v1007
    %1012 = vst [vmem:[#allocation2 + $0x50] sm:$0xff] %v1008
    %1013 = vst [vmem:[#allocation2 + $0x58] sm:$0xff] %v1009
    %1014 = vrot.lane.b32.xlu0 %v950, 1
    %v1015 = vpop.permute.xlu0 %1014
    %1016 = vrot.lane.b32.xlu0 %v952, 1
    %v1017 = vpop.permute.xlu0 %1016
    %1018 = vrot.lane.b32.xlu0 %v951, 1
    %v1019 = vpop.permute.xlu0 %1018
    %1020 = vrot.lane.b32.xlu0 %v953, 1
    %v1021 = vpop.permute.xlu0 %1020
    %v1022 = vsel %vm161, %v1015, %v1019
    %v1023 = vsel %vm161, %v1017, %v1021
    %v1024 = vsel %vm161, %v1019, %v1015
    %v1025 = vsel %vm161, %v1021, %v1017
    %v1026 = vmul.f32 %v1024, %v169
    %v1027 = vmul.f32 %v1022, %v173
    %v1028 = vmul.f32 %v1025, %v169
    %v1029 = vmul.f32 %v1023, %v173
    %1030 = vst [vmem:[#allocation2 + $0x60] sm:$0xff] %v1026
    %1031 = vst [vmem:[#allocation2 + $0x68] sm:$0xff] %v1027
    %1032 = vst [vmem:[#allocation2 + $0x70] sm:$0xff] %v1028
    %1033 = vst [vmem:[#allocation2 + $0x78] sm:$0xff] %v1029
    %1034 = vst [vmem:[#allocation2 + $0x80] sm:$0xff] %v950
    %1035 = vst [vmem:[#allocation2 + $0x88] sm:$0xff] %v951
    %1036 = vst [vmem:[#allocation2 + $0x90] sm:$0xff] %v952
    %1037 = vst [vmem:[#allocation2 + $0x98] sm:$0xff] %v953
    %1038 = vrot.lane.b32.xlu0 %v950, 127
    %v1039 = vpop.permute.xlu0 %1038
    %1040 = vrot.lane.b32.xlu0 %v952, 127
    %v1041 = vpop.permute.xlu0 %1040
    %1042 = vrot.lane.b32.xlu0 %v951, 127
    %v1043 = vpop.permute.xlu0 %1042
    %1044 = vrot.lane.b32.xlu0 %v953, 127
    %v1045 = vpop.permute.xlu0 %1044
    %v1046 = vsel %vm194, %v1039, %v1043
    %v1047 = vsel %vm194, %v1041, %v1045
    %v1048 = vsel %vm194, %v1043, %v1039
    %v1049 = vsel %vm194, %v1045, %v1041
    %v1050 = vmul.f32 %v1046, %v202
    %v1051 = vmul.f32 %v1048, %v206
    %v1052 = vmul.f32 %v1047, %v202
    %v1053 = vmul.f32 %v1049, %v206
    %1054 = vst [vmem:[#allocation2 + $0xa0] sm:$0xff] %v1050
    %1055 = vst [vmem:[#allocation2 + $0xa8] sm:$0xff] %v1051
    %1056 = vst [vmem:[#allocation2 + $0xb0] sm:$0xff] %v1052
    %1057 = vst [vmem:[#allocation2 + $0xb8] sm:$0xff] %v1053
    %1058 = vrot.lane.b32.xlu0 %v950, 113
    %v1059 = vpop.permute.xlu0 %1058
    %1060 = vrot.lane.b32.xlu0 %v952, 113
    %v1061 = vpop.permute.xlu0 %1060
    %1062 = vrot.lane.b32.xlu0 %v951, 113
    %v1063 = vpop.permute.xlu0 %1062
    %1064 = vrot.lane.b32.xlu0 %v953, 113
    %v1065 = vpop.permute.xlu0 %1064
    %v1066 = vsel %vm223, %v1059, %v1063
    %v1067 = vsel %vm223, %v1061, %v1065
    %v1068 = vsel %vm223, %v1063, %v1059
    %v1069 = vsel %vm223, %v1065, %v1061
    %v1070 = vmul.f32 %v1066, %v231
    %v1071 = vmul.f32 %v1068, %v235
    %v1072 = vmul.f32 %v1067, %v231
    %v1073 = vmul.f32 %v1069, %v235
    %1074 = vst [vmem:[#allocation2 + $0xc0] sm:$0xff] %v1070
    %1075 = vst [vmem:[#allocation2 + $0xc8] sm:$0xff] %v1071
    %1076 = vst [vmem:[#allocation2 + $0xd0] sm:$0xff] %v1072
    %1077 = vst [vmem:[#allocation2 + $0xd8] sm:$0xff] %v1073
    %1078 = vrot.lane.b32.xlu0 %v950, 112
    %v1079 = vpop.permute.xlu0 %1078
    %1080 = vrot.lane.b32.xlu0 %v952, 112
    %v1081 = vpop.permute.xlu0 %1080
    %1082 = vrot.lane.b32.xlu0 %v951, 112
    %v1083 = vpop.permute.xlu0 %1082
    %1084 = vrot.lane.b32.xlu0 %v953, 112
    %v1085 = vpop.permute.xlu0 %1084
    %v1086 = vsel %vm252, %v1079, %v1083
    %v1087 = vsel %vm252, %v1081, %v1085
    %v1088 = vsel %vm252, %v1083, %v1079
    %v1089 = vsel %vm252, %v1085, %v1081
    %v1090 = vmul.f32 %v1086, %v260
    %v1091 = vmul.f32 %v1088, %v264
    %v1092 = vmul.f32 %v1087, %v260
    %v1093 = vmul.f32 %v1089, %v264
    %1094 = vst [vmem:[#allocation2 + $0xe0] sm:$0xff] %v1090
    %1095 = vst [vmem:[#allocation2 + $0xe8] sm:$0xff] %v1091
    %1096 = vst [vmem:[#allocation2 + $0xf0] sm:$0xff] %v1092
    %1097 = vst [vmem:[#allocation2 + $0xf8] sm:$0xff] %v1093
    %1098 = vrot.lane.b32.xlu0 %v950, 111
    %v1099 = vpop.permute.xlu0 %1098
    %1100 = vrot.lane.b32.xlu0 %v952, 111
    %v1101 = vpop.permute.xlu0 %1100
    %1102 = vrot.lane.b32.xlu0 %v951, 111
    %v1103 = vpop.permute.xlu0 %1102
    %1104 = vrot.lane.b32.xlu0 %v953, 111
    %v1105 = vpop.permute.xlu0 %1104
    %v1106 = vsel %vm281, %v1099, %v1103
    %v1107 = vsel %vm281, %v1101, %v1105
    %v1108 = vsel %vm281, %v1103, %v1099
    %v1109 = vsel %vm281, %v1105, %v1101
    %v1110 = vmul.f32 %v1106, %v289
    %v1111 = vmul.f32 %v1108, %v293
    %v1112 = vmul.f32 %v1107, %v289
    %v1113 = vmul.f32 %v1109, %v293
    %1114 = vst [vmem:[#allocation2 + $0x100] sm:$0xff] %v1110
    %1115 = vst [vmem:[#allocation2 + $0x108] sm:$0xff] %v1111
    %1116 = vst [vmem:[#allocation2 + $0x110] sm:$0xff] %v1112
    %1117 = vst [vmem:[#allocation2 + $0x118] sm:$0xff] %v1113
    %v1118 = vld [vmem:[#allocation2] sm:$0xff]
    %v1119 = vld [vmem:[#allocation2 + $0x8] sm:$0xff]
    %v1120 = vld [vmem:[#allocation2 + $0x10] sm:$0xff]
    %v1121 = vld [vmem:[#allocation2 + $0x18] sm:$0xff]
    %v1122 = vld [vmem:[#allocation2 + $0x20] sm:$0xff]
    %v1123 = vld [vmem:[#allocation2 + $0x28] sm:$0xff]
    %v1124 = vld [vmem:[#allocation2 + $0x30] sm:$0xff]
    %v1125 = vld [vmem:[#allocation2 + $0x38] sm:$0xff]
    %v1126 = vld [vmem:[#allocation2 + $0x40] sm:$0xff]
    %v1127 = vld [vmem:[#allocation2 + $0x48] sm:$0xff]
    %v1128 = vld [vmem:[#allocation2 + $0x50] sm:$0xff]
    %v1129 = vld [vmem:[#allocation2 + $0x58] sm:$0xff]
    %v1130 = vld [vmem:[#allocation2 + $0x60] sm:$0xff]
    %v1131 = vld [vmem:[#allocation2 + $0x68] sm:$0xff]
    %v1132 = vld [vmem:[#allocation2 + $0x70] sm:$0xff]
    %v1133 = vld [vmem:[#allocation2 + $0x78] sm:$0xff]
    %v1134 = vld [vmem:[#allocation2 + $0x80] sm:$0xff]
    %v1135 = vld [vmem:[#allocation2 + $0x88] sm:$0xff]
    %v1136 = vld [vmem:[#allocation2 + $0x90] sm:$0xff]
    %v1137 = vld [vmem:[#allocation2 + $0x98] sm:$0xff]
    %v1138 = vld [vmem:[#allocation2 + $0xa0] sm:$0xff]
    %v1139 = vld [vmem:[#allocation2 + $0xa8] sm:$0xff]
    %v1140 = vld [vmem:[#allocation2 + $0xb0] sm:$0xff]
    %v1141 = vld [vmem:[#allocation2 + $0xb8] sm:$0xff]
    %v1142 = vld [vmem:[#allocation2 + $0xc0] sm:$0xff]
    %v1143 = vld [vmem:[#allocation2 + $0xc8] sm:$0xff]
    %v1144 = vld [vmem:[#allocation2 + $0xd0] sm:$0xff]
    %v1145 = vld [vmem:[#allocation2 + $0xd8] sm:$0xff]
    %v1146 = vld [vmem:[#allocation2 + $0xe0] sm:$0xff]
    %v1147 = vld [vmem:[#allocation2 + $0xe8] sm:$0xff]
    %v1148 = vld [vmem:[#allocation2 + $0xf0] sm:$0xff]
    %v1149 = vld [vmem:[#allocation2 + $0xf8] sm:$0xff]
    %v1150 = vld [vmem:[#allocation2 + $0x100] sm:$0xff]
    %v1151 = vld [vmem:[#allocation2 + $0x108] sm:$0xff]
    %v1152 = vld [vmem:[#allocation2 + $0x110] sm:$0xff]
    %v1153 = vld [vmem:[#allocation2 + $0x118] sm:$0xff]
    %1154 = vmatprep.subr.mxu0 %v1119
    %1155 = vmatpush1.msra.mxu0 %v1118
    %1156 = vmatprep.subr.mxu0 %v1121
    %1157 = vmatpush1.msra.mxu0 %v1120
    %1158 = vmatprep.subr.mxu0 %v1123
    %1159 = vmatpush1.msra.mxu0 %v1122
    %1160 = vmatprep.subr.mxu0 %v1125
    %1161 = vmatpush1.msra.mxu0 %v1124
    %1162 = vmatprep.subr.mxu0 %v1127
    %1163 = vmatpush1.msra.mxu0 %v1126
    %1164 = vmatprep.subr.mxu0 %v1129
    %1165 = vmatpush1.msra.mxu0 %v1128
    %1166 = vmatprep.subr.mxu0 %v1131
    %1167 = vmatpush1.msra.mxu0 %v1130
    %1168 = vmatprep.subr.mxu0 %v1133
    %1169 = vmatpush1.msra.mxu0 %v1132
    %1170 = vmatprep.subr.mxu0 %v1135
    %1171 = vmatpush1.msra.mxu0 %v1134
    %1172 = vmatprep.subr.mxu0 %v1137
    %1173 = vmatpush1.msra.mxu0 %v1136
    %1174 = vmatprep.subr.mxu0 %v1139
    %1175 = vmatpush1.msra.mxu0 %v1138
    %1176 = vmatprep.subr.mxu0 %v1141
    %1177 = vmatpush1.msra.mxu0 %v1140
    %1178 = vmatprep.subr.mxu0 %v1143
    %1179 = vmatpush1.msra.mxu0 %v1142
    %1180 = vmatprep.subr.mxu0 %v1145
    %1181 = vmatpush1.msra.mxu0 %v1144
    %1182 = vmatprep.subr.mxu0 %v1147
    %1183 = vmatpush1.msra.mxu0 %v1146
    %1184 = vmatprep.subr.mxu0 %v1149
    %1185 = vmatpush1.msra.mxu0 %v1148
    %1186 = vmatprep.subr.mxu0 %v1151
    %1187 = vmatpush1.msra.mxu0 %v1150
    %1188 = vmatprep.subr.mxu0 %v1153
    %1189 = vmatpush1.msra.mxu0 %v1152
    %1190 = vmatprep.subr.mxu0 0.0
    %1191 = vmatpush1.msra.mxu0 0.0
    %1192 = vmatprep.subr.mxu0 0.0
    %1193 = vmatpush1.msra.mxu0 0.0
    %1194 = vmatprep.subr.mxu0 0.0
    %1195 = vmatpush1.msra.mxu0 0.0
    %1196 = vmatprep.subr.mxu0 0.0
    %1197 = vmatpush1.msra.mxu0 0.0
    %1198 = vmatprep.subr.mxu0 0.0
    %1199 = vmatpush1.msra.mxu0 0.0
    %1200 = vmatprep.subr.mxu0 0.0
    %1201 = vmatpush1.msra.mxu0 0.0
    %1202 = vmatprep.subr.mxu0 0.0
    %1203 = vmatpush1.msra.mxu0 0.0
    %1204 = vmatprep.subr.mxu0 0.0
    %1205 = vmatpush1.msra.mxu0 0.0
    %1206 = vmatprep.subr.mxu0 0.0
    %1207 = vmatpush1.msra.mxu0 0.0
    %1208 = vmatprep.subr.mxu0 0.0
    %1209 = vmatpush1.msra.mxu0 0.0
    %1210 = vmatprep.subr.mxu0 0.0
    %1211 = vmatpush1.msra.mxu0 0.0
    %1212 = vmatprep.subr.mxu0 0.0
    %1213 = vmatpush1.msra.mxu0 0.0
    %1214 = vmatprep.subr.mxu0 0.0
    %1215 = vmatpush1.msra.mxu0 0.0
    %1216 = vmatprep.subr.mxu0 0.0
    %1217 = vmatpush1.msra.mxu0 0.0
    %1218 = vmatprep.mubr.f32.mxu0 %v350
    %1219 = vmatmul.mubr.f32.gmra.mrb[0].mxu0 %v46
    %v1220 = vpop.f32.mrb[0].mxu0
    %v1221 = vadd.f32 %v341, %v1220
    %v1222 = vpop.f32.mrb[0].mxu0
    %v1223 = vadd.f32 %v341, %v1222
    %1224 = vmatprep.mubr.f32.mxu0 %v353
    %1225 = vmatmul.mubr.f32.gmra.mrb[0].mxu0 %v48
    %v1226 = vpop.f32.mrb[0].mxu0
    %v1227 = vadd.f32 %v346, %v1226
    %v1228 = vpop.f32.mrb[0].mxu0
    %v1229 = vadd.f32 %v346, %v1228
    %1230 = vdwg.mxu0
    %v1231 = vmax.f32 %v1221, 0.0
    %v1232 = vmax.f32 %v1223, 0.0
    %v1233 = vmax.f32 %v1227, 0.0
    %v1234 = vmax.f32 %v1229, 0.0
    %v1235 = vadd.f32 %v1231, %v950
    %v1236 = vadd.f32 %v1232, %v951
    %v1237 = vadd.f32 %v1233, %v952
    %v1238 = vadd.f32 %v1234, %v953
    %1239 = vrot.lane.b32.xlu0 %v1235, 17
    %v1240 = vpop.permute.xlu0 %1239
    %1241 = vrot.lane.b32.xlu0 %v1237, 17
    %v1242 = vpop.permute.xlu0 %1241
    %1243 = vrot.lane.b32.xlu0 %v1236, 17
    %v1244 = vpop.permute.xlu0 %1243
    %1245 = vrot.lane.b32.xlu0 %v1238, 17
    %v1246 = vpop.permute.xlu0 %1245
    %v1247 = vsel %vm74, %v1240, %v1244
    %v1248 = vsel %vm74, %v1242, %v1246
    %v1249 = vsel %vm74, %v1244, %v1240
    %v1250 = vsel %vm74, %v1246, %v1242
    %v1251 = vmul.f32 %v1249, %v82
    %v1252 = vmul.f32 %v1247, %v86
    %v1253 = vmul.f32 %v1250, %v82
    %v1254 = vmul.f32 %v1248, %v86
    %1255 = vst [vmem:[#allocation2] sm:$0xff] %v1251
    %1256 = vst [vmem:[#allocation2 + $0x8] sm:$0xff] %v1252
    %1257 = vst [vmem:[#allocation2 + $0x10] sm:$0xff] %v1253
    %1258 = vst [vmem:[#allocation2 + $0x18] sm:$0xff] %v1254
    %1259 = vrot.lane.b32.xlu0 %v1235, 16
    %v1260 = vpop.permute.xlu0 %1259
    %1261 = vrot.lane.b32.xlu0 %v1237, 16
    %v1262 = vpop.permute.xlu0 %1261
    %1263 = vrot.lane.b32.xlu0 %v1236, 16
    %v1264 = vpop.permute.xlu0 %1263
    %1265 = vrot.lane.b32.xlu0 %v1238, 16
    %v1266 = vpop.permute.xlu0 %1265
    %v1267 = vsel %vm103, %v1260, %v1264
    %v1268 = vsel %vm103, %v1262, %v1266
    %v1269 = vsel %vm103, %v1264, %v1260
    %v1270 = vsel %vm103, %v1266, %v1262
    %v1271 = vmul.f32 %v1269, %v111
    %v1272 = vmul.f32 %v1267, %v115
    %v1273 = vmul.f32 %v1270, %v111
    %v1274 = vmul.f32 %v1268, %v115
    %1275 = vst [vmem:[#allocation2 + $0x20] sm:$0xff] %v1271
    %1276 = vst [vmem:[#allocation2 + $0x28] sm:$0xff] %v1272
    %1277 = vst [vmem:[#allocation2 + $0x30] sm:$0xff] %v1273
    %1278 = vst [vmem:[#allocation2 + $0x38] sm:$0xff] %v1274
    %1279 = vrot.lane.b32.xlu0 %v1235, 15
    %v1280 = vpop.permute.xlu0 %1279
    %1281 = vrot.lane.b32.xlu0 %v1237, 15
    %v1282 = vpop.permute.xlu0 %1281
    %1283 = vrot.lane.b32.xlu0 %v1236, 15
    %v1284 = vpop.permute.xlu0 %1283
    %1285 = vrot.lane.b32.xlu0 %v1238, 15
    %v1286 = vpop.permute.xlu0 %1285
    %v1287 = vsel %vm132, %v1280, %v1284
    %v1288 = vsel %vm132, %v1282, %v1286
    %v1289 = vsel %vm132, %v1284, %v1280
    %v1290 = vsel %vm132, %v1286, %v1282
    %v1291 = vmul.f32 %v1289, %v140
    %v1292 = vmul.f32 %v1287, %v144
    %v1293 = vmul.f32 %v1290, %v140
    %v1294 = vmul.f32 %v1288, %v144
    %1295 = vst [vmem:[#allocation2 + $0x40] sm:$0xff] %v1291
    %1296 = vst [vmem:[#allocation2 + $0x48] sm:$0xff] %v1292
    %1297 = vst [vmem:[#allocation2 + $0x50] sm:$0xff] %v1293
    %1298 = vst [vmem:[#allocation2 + $0x58] sm:$0xff] %v1294
    %1299 = vrot.lane.b32.xlu0 %v1235, 1
    %v1300 = vpop.permute.xlu0 %1299
    %1301 = vrot.lane.b32.xlu0 %v1237, 1
    %v1302 = vpop.permute.xlu0 %1301
    %1303 = vrot.lane.b32.xlu0 %v1236, 1
    %v1304 = vpop.permute.xlu0 %1303
    %1305 = vrot.lane.b32.xlu0 %v1238, 1
    %v1306 = vpop.permute.xlu0 %1305
    %v1307 = vsel %vm161, %v1300, %v1304
    %v1308 = vsel %vm161, %v1302, %v1306
    %v1309 = vsel %vm161, %v1304, %v1300
    %v1310 = vsel %vm161, %v1306, %v1302
    %v1311 = vmul.f32 %v1309, %v169
    %v1312 = vmul.f32 %v1307, %v173
    %v1313 = vmul.f32 %v1310, %v169
    %v1314 = vmul.f32 %v1308, %v173
    %1315 = vst [vmem:[#allocation2 + $0x60] sm:$0xff] %v1311
    %1316 = vst [vmem:[#allocation2 + $0x68] sm:$0xff] %v1312
    %1317 = vst [vmem:[#allocation2 + $0x70] sm:$0xff] %v1313
    %1318 = vst [vmem:[#allocation2 + $0x78] sm:$0xff] %v1314
    %1319 = vst [vmem:[#allocation2 + $0x80] sm:$0xff] %v1235
    %1320 = vst [vmem:[#allocation2 + $0x88] sm:$0xff] %v1236
    %1321 = vst [vmem:[#allocation2 + $0x90] sm:$0xff] %v1237
    %1322 = vst [vmem:[#allocation2 + $0x98] sm:$0xff] %v1238
    %1323 = vrot.lane.b32.xlu0 %v1235, 127
    %v1324 = vpop.permute.xlu0 %1323
    %1325 = vrot.lane.b32.xlu0 %v1237, 127
    %v1326 = vpop.permute.xlu0 %1325
    %1327 = vrot.lane.b32.xlu0 %v1236, 127
    %v1328 = vpop.permute.xlu0 %1327
    %1329 = vrot.lane.b32.xlu0 %v1238, 127
    %v1330 = vpop.permute.xlu0 %1329
    %v1331 = vsel %vm194, %v1324, %v1328
    %v1332 = vsel %vm194, %v1326, %v1330
    %v1333 = vsel %vm194, %v1328, %v1324
    %v1334 = vsel %vm194, %v1330, %v1326
    %v1335 = vmul.f32 %v1331, %v202
    %v1336 = vmul.f32 %v1333, %v206
    %v1337 = vmul.f32 %v1332, %v202
    %v1338 = vmul.f32 %v1334, %v206
    %1339 = vst [vmem:[#allocation2 + $0xa0] sm:$0xff] %v1335
    %1340 = vst [vmem:[#allocation2 + $0xa8] sm:$0xff] %v1336
    %1341 = vst [vmem:[#allocation2 + $0xb0] sm:$0xff] %v1337
    %1342 = vst [vmem:[#allocation2 + $0xb8] sm:$0xff] %v1338
    %1343 = vrot.lane.b32.xlu0 %v1235, 113
    %v1344 = vpop.permute.xlu0 %1343
    %1345 = vrot.lane.b32.xlu0 %v1237, 113
    %v1346 = vpop.permute.xlu0 %1345
    %1347 = vrot.lane.b32.xlu0 %v1236, 113
    %v1348 = vpop.permute.xlu0 %1347
    %1349 = vrot.lane.b32.xlu0 %v1238, 113
    %v1350 = vpop.permute.xlu0 %1349
    %v1351 = vsel %vm223, %v1344, %v1348
    %v1352 = vsel %vm223, %v1346, %v1350
    %v1353 = vsel %vm223, %v1348, %v1344
    %v1354 = vsel %vm223, %v1350, %v1346
    %v1355 = vmul.f32 %v1351, %v231
    %v1356 = vmul.f32 %v1353, %v235
    %v1357 = vmul.f32 %v1352, %v231
    %v1358 = vmul.f32 %v1354, %v235
    %1359 = vst [vmem:[#allocation2 + $0xc0] sm:$0xff] %v1355
    %1360 = vst [vmem:[#allocation2 + $0xc8] sm:$0xff] %v1356
    %1361 = vst [vmem:[#allocation2 + $0xd0] sm:$0xff] %v1357
    %1362 = vst [vmem:[#allocation2 + $0xd8] sm:$0xff] %v1358
    %1363 = vrot.lane.b32.xlu0 %v1235, 112
    %v1364 = vpop.permute.xlu0 %1363
    %1365 = vrot.lane.b32.xlu0 %v1237, 112
    %v1366 = vpop.permute.xlu0 %1365
    %1367 = vrot.lane.b32.xlu0 %v1236, 112
    %v1368 = vpop.permute.xlu0 %1367
    %1369 = vrot.lane.b32.xlu0 %v1238, 112
    %v1370 = vpop.permute.xlu0 %1369
    %v1371 = vsel %vm252, %v1364, %v1368
    %v1372 = vsel %vm252, %v1366, %v1370
    %v1373 = vsel %vm252, %v1368, %v1364
    %v1374 = vsel %vm252, %v1370, %v1366
    %v1375 = vmul.f32 %v1371, %v260
    %v1376 = vmul.f32 %v1373, %v264
    %v1377 = vmul.f32 %v1372, %v260
    %v1378 = vmul.f32 %v1374, %v264
    %1379 = vst [vmem:[#allocation2 + $0xe0] sm:$0xff] %v1375
    %1380 = vst [vmem:[#allocation2 + $0xe8] sm:$0xff] %v1376
    %1381 = vst [vmem:[#allocation2 + $0xf0] sm:$0xff] %v1377
    %1382 = vst [vmem:[#allocation2 + $0xf8] sm:$0xff] %v1378
    %1383 = vrot.lane.b32.xlu0 %v1235, 111
    %v1384 = vpop.permute.xlu0 %1383
    %1385 = vrot.lane.b32.xlu0 %v1237, 111
    %v1386 = vpop.permute.xlu0 %1385
    %1387 = vrot.lane.b32.xlu0 %v1236, 111
    %v1388 = vpop.permute.xlu0 %1387
    %1389 = vrot.lane.b32.xlu0 %v1238, 111
    %v1390 = vpop.permute.xlu0 %1389
    %v1391 = vsel %vm281, %v1384, %v1388
    %v1392 = vsel %vm281, %v1386, %v1390
    %v1393 = vsel %vm281, %v1388, %v1384
    %v1394 = vsel %vm281, %v1390, %v1386
    %v1395 = vmul.f32 %v1391, %v289
    %v1396 = vmul.f32 %v1393, %v293
    %v1397 = vmul.f32 %v1392, %v289
    %v1398 = vmul.f32 %v1394, %v293
    %1399 = vst [vmem:[#allocation2 + $0x100] sm:$0xff] %v1395
    %1400 = vst [vmem:[#allocation2 + $0x108] sm:$0xff] %v1396
    %1401 = vst [vmem:[#allocation2 + $0x110] sm:$0xff] %v1397
    %1402 = vst [vmem:[#allocation2 + $0x118] sm:$0xff] %v1398
    %v1403 = vld [vmem:[#allocation2] sm:$0xff]
    %v1404 = vld [vmem:[#allocation2 + $0x8] sm:$0xff]
    %v1405 = vld [vmem:[#allocation2 + $0x10] sm:$0xff]
    %v1406 = vld [vmem:[#allocation2 + $0x18] sm:$0xff]
    %v1407 = vld [vmem:[#allocation2 + $0x20] sm:$0xff]
    %v1408 = vld [vmem:[#allocation2 + $0x28] sm:$0xff]
    %v1409 = vld [vmem:[#allocation2 + $0x30] sm:$0xff]
    %v1410 = vld [vmem:[#allocation2 + $0x38] sm:$0xff]
    %v1411 = vld [vmem:[#allocation2 + $0x40] sm:$0xff]
    %v1412 = vld [vmem:[#allocation2 + $0x48] sm:$0xff]
    %v1413 = vld [vmem:[#allocation2 + $0x50] sm:$0xff]
    %v1414 = vld [vmem:[#allocation2 + $0x58] sm:$0xff]
    %v1415 = vld [vmem:[#allocation2 + $0x60] sm:$0xff]
    %v1416 = vld [vmem:[#allocation2 + $0x68] sm:$0xff]
    %v1417 = vld [vmem:[#allocation2 + $0x70] sm:$0xff]
    %v1418 = vld [vmem:[#allocation2 + $0x78] sm:$0xff]
    %v1419 = vld [vmem:[#allocation2 + $0x80] sm:$0xff]
    %v1420 = vld [vmem:[#allocation2 + $0x88] sm:$0xff]
    %v1421 = vld [vmem:[#allocation2 + $0x90] sm:$0xff]
    %v1422 = vld [vmem:[#allocation2 + $0x98] sm:$0xff]
    %v1423 = vld [vmem:[#allocation2 + $0xa0] sm:$0xff]
    %v1424 = vld [vmem:[#allocation2 + $0xa8] sm:$0xff]
    %v1425 = vld [vmem:[#allocation2 + $0xb0] sm:$0xff]
    %v1426 = vld [vmem:[#allocation2 + $0xb8] sm:$0xff]
    %v1427 = vld [vmem:[#allocation2 + $0xc0] sm:$0xff]
    %v1428 = vld [vmem:[#allocation2 + $0xc8] sm:$0xff]
    %v1429 = vld [vmem:[#allocation2 + $0xd0] sm:$0xff]
    %v1430 = vld [vmem:[#allocation2 + $0xd8] sm:$0xff]
    %v1431 = vld [vmem:[#allocation2 + $0xe0] sm:$0xff]
    %v1432 = vld [vmem:[#allocation2 + $0xe8] sm:$0xff]
    %v1433 = vld [vmem:[#allocation2 + $0xf0] sm:$0xff]
    %v1434 = vld [vmem:[#allocation2 + $0xf8] sm:$0xff]
    %v1435 = vld [vmem:[#allocation2 + $0x100] sm:$0xff]
    %v1436 = vld [vmem:[#allocation2 + $0x108] sm:$0xff]
    %v1437 = vld [vmem:[#allocation2 + $0x110] sm:$0xff]
    %v1438 = vld [vmem:[#allocation2 + $0x118] sm:$0xff]
    %1439 = vmatprep.subr.mxu0 %v1404
    %1440 = vmatpush1.msra.mxu0 %v1403
    %1441 = vmatprep.subr.mxu0 %v1406
    %1442 = vmatpush1.msra.mxu0 %v1405
    %1443 = vmatprep.subr.mxu0 %v1408
    %1444 = vmatpush1.msra.mxu0 %v1407
    %1445 = vmatprep.subr.mxu0 %v1410
    %1446 = vmatpush1.msra.mxu0 %v1409
    %1447 = vmatprep.subr.mxu0 %v1412
    %1448 = vmatpush1.msra.mxu0 %v1411
    %1449 = vmatprep.subr.mxu0 %v1414
    %1450 = vmatpush1.msra.mxu0 %v1413
    %1451 = vmatprep.subr.mxu0 %v1416
    %1452 = vmatpush1.msra.mxu0 %v1415
    %1453 = vmatprep.subr.mxu0 %v1418
    %1454 = vmatpush1.msra.mxu0 %v1417
    %1455 = vmatprep.subr.mxu0 %v1420
    %1456 = vmatpush1.msra.mxu0 %v1419
    %1457 = vmatprep.subr.mxu0 %v1422
    %1458 = vmatpush1.msra.mxu0 %v1421
    %1459 = vmatprep.subr.mxu0 %v1424
    %1460 = vmatpush1.msra.mxu0 %v1423
    %1461 = vmatprep.subr.mxu0 %v1426
    %1462 = vmatpush1.msra.mxu0 %v1425
    %1463 = vmatprep.subr.mxu0 %v1428
    %1464 = vmatpush1.msra.mxu0 %v1427
    %1465 = vmatprep.subr.mxu0 %v1430
    %1466 = vmatpush1.msra.mxu0 %v1429
    %1467 = vmatprep.subr.mxu0 %v1432
    %1468 = vmatpush1.msra.mxu0 %v1431
    %1469 = vmatprep.subr.mxu0 %v1434
    %1470 = vmatpush1.msra.mxu0 %v1433
    %1471 = vmatprep.subr.mxu0 %v1436
    %1472 = vmatpush1.msra.mxu0 %v1435
    %1473 = vmatprep.subr.mxu0 %v1438
    %1474 = vmatpush1.msra.mxu0 %v1437
    %1475 = vmatprep.subr.mxu0 0.0
    %1476 = vmatpush1.msra.mxu0 0.0
    %1477 = vmatprep.subr.mxu0 0.0
    %1478 = vmatpush1.msra.mxu0 0.0
    %1479 = vmatprep.subr.mxu0 0.0
    %1480 = vmatpush1.msra.mxu0 0.0
    %1481 = vmatprep.subr.mxu0 0.0
    %1482 = vmatpush1.msra.mxu0 0.0
    %1483 = vmatprep.subr.mxu0 0.0
    %1484 = vmatpush1.msra.mxu0 0.0
    %1485 = vmatprep.subr.mxu0 0.0
    %1486 = vmatpush1.msra.mxu0 0.0
    %1487 = vmatprep.subr.mxu0 0.0
    %1488 = vmatpush1.msra.mxu0 0.0
    %1489 = vmatprep.subr.mxu0 0.0
    %1490 = vmatpush1.msra.mxu0 0.0
    %1491 = vmatprep.subr.mxu0 0.0
    %1492 = vmatpush1.msra.mxu0 0.0
    %1493 = vmatprep.subr.mxu0 0.0
    %1494 = vmatpush1.msra.mxu0 0.0
    %1495 = vmatprep.subr.mxu0 0.0
    %1496 = vmatpush1.msra.mxu0 0.0
    %1497 = vmatprep.subr.mxu0 0.0
    %1498 = vmatpush1.msra.mxu0 0.0
    %1499 = vmatprep.subr.mxu0 0.0
    %1500 = vmatpush1.msra.mxu0 0.0
    %1501 = vmatprep.subr.mxu0 0.0
    %1502 = vmatpush1.msra.mxu0 0.0
    %1503 = vmatprep.mubr.f32.mxu0 %v649
    %1504 = vmatmul.mubr.f32.gmra.mrb[0].mxu0 %v51
    %v1505 = vpop.f32.mrb[0].mxu0
    %v1506 = vadd.f32 %v642, %v1505
    %v1507 = vpop.f32.mrb[0].mxu0
    %v1508 = vadd.f32 %v642, %v1507
    %1509 = vmatprep.mubr.f32.mxu0 %v652
    %1510 = vmatmul.mubr.f32.gmra.mrb[0].mxu0 %v53
    %v1511 = vpop.f32.mrb[0].mxu0
    %v1512 = vadd.f32 %v646, %v1511
    %v1513 = vpop.f32.mrb[0].mxu0
    %v1514 = vadd.f32 %v646, %v1513
    %1515 = vdwg.mxu0
    %v1516 = vadd.f32 %v1506, %v1508
    %1517 = vadd.xlane.f32.xlu0 %v1516
    %v1518 = vpop.xlane.xlu0 %1517
    %v1519 = vadd.f32 %v1512, %v1514
    %1520 = vadd.xlane.f32.xlu0 %v1519
    %v1521 = vpop.xlane.xlu0 %1520
    %v1522 = vmul.f32 %v1518, %v737
    %v1523 = vmul.f32 %v1521, %v737
    %v1524 = vmul.f32 %v57, %v1522
    %v1525 = vmul.f32 %v58, %v1523
    %v1526 = vsel %vm742, %v1524, 0.0
    %v1527 = vsel %vm742, %v1525, 0.0
    %v1528 = vadd.f32 %v1526, %v1527
    %v1529 = vrot.slane %v1528, 4
    %v1530 = vadd.f32 %v1528, %v1529
    %v1531 = vrot.slane %v1530, 2
    %v1532 = vadd.f32 %v1530, %v1531
    %v1533 = vrot.slane %v1532, 1
    %v1534 = vadd.f32 %v1532, %v1533
    %v1535 = vadd.f32 %v1534, %v753
    %v1536 = vmax.f32 %v1535, 0.0
    %v1537 = vlaneseq
    %v1538 = vshrl.u32 %v1537, 7
    %v1539 = vsub.s32 0, %v1538
    %v1540 = vrot.slane %v1536, %v1539
    %1542 = vrot.lane.b32.xlu0 %v1540, 2
    %v1543 = vpop.permute.xlu0 %1542
    %v1545 = vmul.f32 %v57, %v1543
    %v1546 = vmul.f32 %v58, %v1543
    %1549 = vrot.lane.b32.xlu0 %v1545, 123
    %v1550 = vpop.permute.xlu0 %1549
    %1551 = vrot.lane.b32.xlu0 %v1546, 123
    %v1552 = vpop.permute.xlu0 %1551
    %v1555 = vsel %vm775, %v1550, 0.0
    %1556 = vadd.xlane.f32.xlu0 %v1555
    %v1557 = vpop.xlane.xlu0 %1556
    %v1558 = vsel %vm775, %v1552, 0.0
    %1559 = vadd.xlane.f32.xlu0 %v1558
    %v1560 = vpop.xlane.xlu0 %1559
    %v1561 = vadd.f32 %v1557, %v57
    %v1562 = vadd.f32 %v1560, %v58
    %v1563 = vxor.u32 %v1561, 2147483648
    %v1564 = vxor.u32 %v1562, 2147483648
    %v1565 = vmul.f32 %v1563, 1.442695
    %v1566 = vpow.pop %v1565
    %v1567 = vmul.f32 %v1564, 1.442695
    %v1568 = vpow.pop %v1567
    %v1569 = vadd.f32 %v1566, 1.0
    %v1570 = vadd.f32 %v1568, 1.0
    %v1571 = vrcp.pop %v1569
    %v1572 = vmul.f32 1.0, %v1571
    %v1573 = vrcp.pop %v1570
    %v1574 = vmul.f32 1.0, %v1573
    %1576 = vset.pattern.permute.xlu0 2
    %1577 = vperm.xlu0 %1576, %v1572
    %v1578 = vpop.permute.xlu0 %1577
    %1581 = vset.pattern.permute.xlu0 2
    %1582 = vperm.xlu0 %1581, %v1574
    %v1583 = vpop.permute.xlu0 %1582
    %v1585 = vmul.f32 %v1506, %v1578
    %v1586 = vmul.f32 %v1508, %v1578
    %v1587 = vmul.f32 %v1512, %v1583
    %v1588 = vmul.f32 %v1514, %v1583
    %1589 = vmatprep.subr.mxu0 %v1586
    %1590 = vmatpush1.msra.mxu0 %v1585
    %1591 = vmatprep.subr.mxu0 %v1588
    %1592 = vmatpush1.msra.mxu0 %v1587
    %1593 = vmatprep.subr.mxu0 0.0
    %1594 = vmatpush1.msra.mxu0 0.0
    %1595 = vmatprep.subr.mxu0 0.0
    %1596 = vmatpush1.msra.mxu0 0.0
    %1597 = vmatprep.subr.mxu0 0.0
    %1598 = vmatpush1.msra.mxu0 0.0
    %1599 = vmatprep.subr.mxu0 0.0
    %1600 = vmatpush1.msra.mxu0 0.0
    %1601 = vmatprep.subr.mxu0 0.0
    %1602 = vmatpush1.msra.mxu0 0.0
    %1603 = vmatprep.subr.mxu0 0.0
    %1604 = vmatpush1.msra.mxu0 0.0
    %1605 = vmatprep.subr.mxu0 0.0
    %1606 = vmatpush1.msra.mxu0 0.0
    %1607 = vmatprep.subr.mxu0 0.0
    %1608 = vmatpush1.msra.mxu0 0.0
    %1609 = vmatprep.subr.mxu0 0.0
    %1610 = vmatpush1.msra.mxu0 0.0
    %1611 = vmatprep.subr.mxu0 0.0
    %1612 = vmatpush1.msra.mxu0 0.0
    %1613 = vmatprep.subr.mxu0 0.0
    %1614 = vmatpush1.msra.mxu0 0.0
    %1615 = vmatprep.subr.mxu0 0.0
    %1616 = vmatpush1.msra.mxu0 0.0
    %1617 = vmatprep.subr.mxu0 0.0
    %1618 = vmatpush1.msra.mxu0 0.0
    %1619 = vmatprep.subr.mxu0 0.0
    %1620 = vmatpush1.msra.mxu0 0.0
    %1621 = vmatprep.subr.mxu0 0.0
    %1622 = vmatpush1.msra.mxu0 0.0
    %1623 = vmatprep.subr.mxu0 0.0
    %1624 = vmatpush1.msra.mxu0 0.0
    %1625 = vmatprep.subr.mxu0 0.0
    %1626 = vmatpush1.msra.mxu0 0.0
    %1627 = vmatprep.subr.mxu0 0.0
    %1628 = vmatpush1.msra.mxu0 0.0
    %1629 = vmatprep.subr.mxu0 0.0
    %1630 = vmatpush1.msra.mxu0 0.0
    %1631 = vmatprep.subr.mxu0 0.0
    %1632 = vmatpush1.msra.mxu0 0.0
    %1633 = vmatprep.subr.mxu0 0.0
    %1634 = vmatpush1.msra.mxu0 0.0
    %1635 = vmatprep.subr.mxu0 0.0
    %1636 = vmatpush1.msra.mxu0 0.0
    %1637 = vmatprep.subr.mxu0 0.0
    %1638 = vmatpush1.msra.mxu0 0.0
    %1639 = vmatprep.subr.mxu0 0.0
    %1640 = vmatpush1.msra.mxu0 0.0
    %1641 = vmatprep.subr.mxu0 0.0
    %1642 = vmatpush1.msra.mxu0 0.0
    %1643 = vmatprep.subr.mxu0 0.0
    %1644 = vmatpush1.msra.mxu0 0.0
    %1645 = vmatprep.subr.mxu0 0.0
    %1646 = vmatpush1.msra.mxu0 0.0
    %1647 = vmatprep.subr.mxu0 0.0
    %1648 = vmatpush1.msra.mxu0 0.0
    %1649 = vmatprep.subr.mxu0 0.0
    %1650 = vmatpush1.msra.mxu0 0.0
    %1651 = vmatprep.subr.mxu0 0.0
    %1652 = vmatpush1.msra.mxu0 0.0
    %1653 = vmatprep.mubr.f32.mxu0 0.0
    %1654 = vmatmul.mubr.f32.gmra.mrb[0].mxu0 %v815
    %v1655 = vpop.f32.mrb[0].mxu0
    %v1656 = vadd.f32 %v812, %v1655
    %v1657 = vpop.f32.mrb[0].mxu0
    %v1658 = vadd.f32 %v812, %v1657
    %1659 = vdwg.mxu0
    %v1660 = vmax.f32 %v1656, 0.0
    %v1661 = vmax.f32 %v1658, 0.0
    %v1662 = vmul.f32 %v1660, %v892
    %v1663 = vmul.f32 %v1661, %v892
    %v1664 = vsel %vm896, %v1662, 0.0
    %v1665 = vrot.slane %v1664, 4
    %v1666 = vadd.f32 %v1664, %v1665
    %v1667 = vrot.slane %v1666, 2
    %v1668 = vadd.f32 %v1666, %v1667
    %v1669 = vrot.slane %v1668, 1
    %v1670 = vadd.f32 %v1668, %v1669
    %v1671 = vsel %vm896, %v1663, 0.0
    %v1672 = vrot.slane %v1671, 4
    %v1673 = vadd.f32 %v1671, %v1672
    %v1674 = vrot.slane %v1673, 2
    %v1675 = vadd.f32 %v1673, %v1674
    %v1676 = vrot.slane %v1675, 1
    %v1677 = vadd.f32 %v1675, %v1676
    %v1678 = vadd.f32 %v1670, %v913
    %v1679 = vadd.f32 %v1677, %v913
    %v1680 = vxor.u32 %v1678, 2147483648
    %v1681 = vxor.u32 %v1679, 2147483648
    %v1682 = vmul.f32 %v1680, 1.442695
    %v1683 = vpow.pop %v1682
    %v1684 = vmul.f32 %v1681, 1.442695
    %v1685 = vpow.pop %v1684
    %v1686 = vadd.f32 %v1683, 1.0
    %v1687 = vadd.f32 %v1685, 1.0
    %v1688 = vrcp.pop %v1686
    %v1689 = vmul.f32 1.0, %v1688
    %v1690 = vrcp.pop %v1687
    %v1691 = vmul.f32 1.0, %v1690
    %v1692 = vlaneseq
    %v1693 = vshrl.u32 %v1692, 7
    %v1694 = vsub.s32 0, %v1693
    %v1695 = vrot.slane %v1689, %v1694
    %v1696 = vlaneseq
    %v1697 = vshrl.u32 %v1696, 7
    %v1698 = vsub.s32 0, %v1697
    %v1699 = vrot.slane %v1691, %v1698
    %v1700 = vmul.f32 %v1585, %v1695
    %v1701 = vmul.f32 %v1586, %v1699
    %v1702 = vmul.f32 %v1587, %v1695
    %v1703 = vmul.f32 %v1588, %v1699
    %v1704 = vadd.f32 %v1700, %v950
    %v1705 = vadd.f32 %v1701, %v951
    %v1706 = vadd.f32 %v1702, %v952
    %v1707 = vadd.f32 %v1703, %v953
    %s1708 = scalar_lea.vmem [#allocation8], 32
    %1709 = vst [vmem:[%s1708] sm:$0xff] %v1704
    %1710 = vst [vmem:[%s1708 + $0x8] sm:$0xff] %v1705
    %1711 = vst [vmem:[%s1708 + $0x10] sm:$0xff] %v1706
    %1712 = vst [vmem:[%s1708 + $0x18] sm:$0xff] %v1707
    // Predicated region
    $region26: #{tpu_custom_call.1} parent=1 // pred_check
      _
    $region27: #{tpu_custom_call.1} parent=1 // pred_check_branch
      %1714 = sbr.rel (0) target = $region29
    $region28: #{tpu_custom_call.1} parent=1 // pred_region
      %s1716 = ssub.s32 1024, 1024
      %1717 = vsyncadd [#allocation5], %s1716
      %s1718 = sshll.u32 [#allocation8], 4
      %s1719 = int_to_ptr.vmem [resolvable:$true] %s1718
      %1724 = dma.vmem_to_hbm [thread:$0]  %s1719, 1024, %s4, [#allocation5], 256, 256, 16
    $region29: #{tpu_custom_call.1} parent=1 // pred_fallthru
      _
    // Predicated region
    $region30: #{tpu_custom_call.1} parent=1 // pred_check
      _
    $region31: #{tpu_custom_call.1} parent=1 // pred_check_branch
      %1726 = sbr.rel (0) target = $region33
    $region32: #{tpu_custom_call.1} parent=1 // pred_region
      %1727 = dma.done [#allocation5], 1024
    $region33: #{tpu_custom_call.1} parent=1 // pred_fallthru
      _
    %1728 = vsyncpa [#allocation4], 1
    %1729 = vsyncpa [#allocation7], 1
    %1730 = vsyncpa [#allocation5], 1

</llo_original>
